<compile_context>
chip_gen: v7x
topology: tpu7x:2x2x1
jax: 0.10.0
libtpu: 0.0.40
codegen_flags: <defaults>
</compile_context>

<pallas_src>
import functools
import math

import jax
import jax.numpy as jnp
from jax.experimental import pallas as pl
from jax.experimental.pallas import tpu as pltpu


def _round_up(x, m):
    return ((x + m - 1) // m) * m


def icm_kernel(
    obs_ref, act_ref, nobs_ref,                 # streamed (TB, feat) f32
    w1_obs_ref, w1_act_ref, w1_nobs_ref, b1_ref,  # fused layer-1 params (bf16 / f32 bias)
    w2_ref, b2_ref,                               # block-diag layer-2 params
    err_ref,                                      # (2, TB) f32, lane-dense
    *, obs_dim,
):
    f32 = jnp.float32
    bf16 = jnp.bfloat16

    obs = obs_ref[...]      # (TB, obs_dim)  f32
    act = act_ref[...]      # (TB, act_dim)  f32
    nobs = nobs_ref[...]    # (TB, obs_dim)  f32

    # ---- Layer 1 (both nets at once, 2H wide, no lane slicing) -----------
    # forward_net layer1:  cat([obs, act])  @ w1f = obs @ w1f_obs + act @ w1f_act
    # backward_net layer1: cat([obs, nobs]) @ w1b = obs @ w1b_obs + nobs @ w1b_nobs
    # Fused weights: w1_obs = [w1f_obs | w1b_obs], w1_act = [w1f_act | 0],
    #                w1_nobs = [0 | w1b_nobs], b1 = [b1f | b1b].
    h = (jnp.dot(obs.astype(bf16), w1_obs_ref[...], preferred_element_type=f32)
         + jnp.dot(act.astype(bf16), w1_act_ref[...], preferred_element_type=f32)
         + jnp.dot(nobs.astype(bf16), w1_nobs_ref[...], preferred_element_type=f32)
         + b1_ref[...])
    h = jnp.maximum(h, 0.0)                          # (TB, 2H) f32

    # ---- Layer 2 (block-diagonal fusion) ----------------------------------
    # w2 = blockdiag(w2f, w2b): h @ w2 = [h_f @ w2f | h_b @ w2b]; b2 = [b2f | b2b].
    out = (jnp.dot(h.astype(bf16), w2_ref[...], preferred_element_type=f32)
           + b2_ref[...])                            # (TB, obs_dim + act_dim) f32
    feat = out.shape[-1]
    col = jax.lax.broadcasted_iota(jnp.int32, out.shape, 1)
    # Tanh only on the backward-net (action) columns.
    out = jnp.where(col < obs_dim, out, jnp.tanh(out))

    # ---- Errors: single diff, single MXU selector-reduction ---------------
    target = jnp.concatenate([nobs, act], axis=-1)   # f32 targets (exact inputs)
    d = target - out
    d2 = d * d

    # Selector rows: row 0 picks the obs columns, row 1 the action columns.
    srow = jax.lax.broadcasted_iota(jnp.int32, (2, feat), 0)
    scol = jax.lax.broadcasted_iota(jnp.int32, (2, feat), 1)
    sel = jnp.where((scol < obs_dim) == (srow == 0), 1.0, 0.0).astype(f32)

    # (2, F) . (TB, F) contracted over F -> (2, TB): batch lands on the lane
    # axis, so the store below is a single lane-dense full-tile assignment.
    sq = jax.lax.dot_general(sel, d2, (((1,), (1,)), ((), ())),
                             preferred_element_type=f32)
    err_ref[...] = jnp.sqrt(sq)


def icm_forward(obs, action, next_obs, params, *, block_b=4096):
    """Returns (forward_error, backward_error), each (B, 1) f32."""
    assert obs.shape[0] == next_obs.shape[0]
    assert obs.shape[0] == action.shape[0]

    B, obs_dim = obs.shape
    action_dim = action.shape[1]
    w1_obs, w1_act, w1_nobs, b1, w2, b2 = params

    # Batch tile: big (amortizes per-step overhead), but clamped so the grid has
    # >= 2 steps whenever possible (lets v7x's two TensorCores split the batch
    # and keeps the writeback pipelined).  Multiple of 128 -> lane-aligned.
    tb = min(block_b, _round_up(pl.cdiv(B, 2), 128))
    if tb >= B:
        tb, grid_b = B, 1                       # tiny batch: one exact full tile
    else:
        grid_b = pl.cdiv(B, tb)                 # partial last tile handled by Pallas

    def stream_spec(feat):
        return pl.BlockSpec((tb, feat), lambda i: (i, 0))

    def const_spec(arr):
        # Weight/bias stays VMEM-resident: same (0, 0) block for every grid step.
        return pl.BlockSpec(arr.shape, lambda i: (0, 0))

    weights = (w1_obs, w1_act, w1_nobs, b1, w2, b2)
    in_specs = [stream_spec(obs_dim), stream_spec(action_dim), stream_spec(obs_dim)]
    in_specs += [const_spec(w) for w in weights]
    out_spec = pl.BlockSpec((2, tb), lambda i: (0, i))

    err = pl.pallas_call(
        functools.partial(icm_kernel, obs_dim=obs_dim),
        grid=(grid_b,),
        in_specs=in_specs,
        out_specs=out_spec,
        out_shape=jax.ShapeDtypeStruct((2, B), jnp.float32),
        compiler_params=pltpu.CompilerParams(
            dimension_semantics=("parallel",),
            vmem_limit_bytes=32 << 20,
        ),
    )(obs, action, next_obs, *weights)

    # Lane-dense (2, B) slab -> the module's (B, 1) outputs (layout plumbing only).
    return err[0, :, None], err[1, :, None]


def init_icm_params(key, obs_dim, action_dim, hidden_dim):
    """Mirrors the PyTorch module's init:
       - weights: kaiming_uniform_(mode='fan_in') -> U(-sqrt(6/fan_in), +sqrt(6/fan_in))
       - biases:  default nn.Linear init          -> U(-1/sqrt(fan_in), +1/sqrt(fan_in))
       Weights are stored transposed (in, out), fused/zero-block-padded for the
       2H-wide layer 1 and block-diagonal layer 2, and cast to bf16."""
    keys = jax.random.split(key, 8)

    def kaiming(k, fan_in, fan_out):
        bound = math.sqrt(6.0 / fan_in)
        return jax.random.uniform(k, (fan_in, fan_out), jnp.float32, -bound, bound)

    def bias(k, fan_in, fan_out):
        bound = 1.0 / math.sqrt(fan_in)
        return jax.random.uniform(k, (1, fan_out), jnp.float32, -bound, bound)

    # forward_net: Linear(obs+act -> H), Linear(H -> obs)
    w1f = kaiming(keys[0], obs_dim + action_dim, hidden_dim)
    b1f = bias(keys[1], obs_dim + action_dim, hidden_dim)
    w2f = kaiming(keys[2], hidden_dim, obs_dim)
    b2f = bias(keys[3], hidden_dim, obs_dim)
    # backward_net: Linear(2*obs -> H), Linear(H -> act)
    w1b = kaiming(keys[4], 2 * obs_dim, hidden_dim)
    b1b = bias(keys[5], 2 * obs_dim, hidden_dim)
    w2b = kaiming(keys[6], hidden_dim, action_dim)
    b2b = bias(keys[7], hidden_dim, action_dim)

    zeros = jnp.zeros
    # Layer 1: fused obs block + zero-block-padded act/next_obs blocks (2H wide).
    w1_obs = jnp.concatenate([w1f[:obs_dim], w1b[:obs_dim]], axis=-1)              # (obs, 2H)
    w1_act = jnp.concatenate([w1f[obs_dim:], zeros((action_dim, hidden_dim))], -1)  # (act, 2H)
    w1_nobs = jnp.concatenate([zeros((obs_dim, hidden_dim)), w1b[obs_dim:]], -1)    # (obs, 2H)
    b1 = jnp.concatenate([b1f, b1b], axis=-1)                                        # (1, 2H)
    # Layer 2: block-diagonal (2H, obs+act) weight + concatenated bias.
    w2 = jnp.block([[w2f, zeros((hidden_dim, action_dim))],
                    [zeros((hidden_dim, obs_dim)), w2b]])                            # (2H, obs+act)
    b2 = jnp.concatenate([b2f, b2b], axis=-1)                                        # (1, obs+act)

    bf16 = jnp.bfloat16
    return (w1_obs.astype(bf16), w1_act.astype(bf16), w1_nobs.astype(bf16),
            b1, w2.astype(bf16), b2)


def icm_reference(obs, action, next_obs, params):
    """Pure-JAX reference mirroring the kernel's math path and dtype handling
       (bf16 casts into each dot, f32 accumulation, f32 norm targets)."""
    w1_obs, w1_act, w1_nobs, b1, w2, b2 = params
    f32 = jnp.float32
    bf = lambda x: x.astype(jnp.bfloat16).astype(f32)
    obs_dim = obs.shape[-1]

    h = (bf(obs) @ w1_obs.astype(f32)
         + bf(action) @ w1_act.astype(f32)
         + bf(next_obs) @ w1_nobs.astype(f32)
         + b1)
    h = jnp.maximum(h, 0.0)
    out = bf(h) @ w2.astype(f32) + b2
    out = out.at[:, obs_dim:].set(jnp.tanh(out[:, obs_dim:]))

    target = jnp.concatenate([next_obs, action], axis=-1)
    d = target - out
    fe = jnp.sqrt(jnp.sum(d[:, :obs_dim] ** 2, axis=-1, keepdims=True))
    be = jnp.sqrt(jnp.sum(d[:, obs_dim:] ** 2, axis=-1, keepdims=True))
    return fe, be


if __name__ == "__main__":
    # Small but multi-tile: B=300 -> tb=256 -> 2 batch tiles (last one partial),
    # exercising the pipelined grid path and the >=2-step v7x floor.
    B, obs_dim, action_dim, hidden_dim = 300, 16, 8, 32

    key = jax.random.PRNGKey(0)
    k_obs, k_act, k_nobs, k_params = jax.random.split(key, 4)
    obs = jax.random.normal(k_obs, (B, obs_dim), jnp.float32)
    action = jax.random.normal(k_act, (B, action_dim), jnp.float32)
    next_obs = jax.random.normal(k_nobs, (B, obs_dim), jnp.float32)

    params = init_icm_params(k_params, obs_dim, action_dim, hidden_dim)

    fwd_err, bwd_err = jax.block_until_ready(
        icm_forward(obs, action, next_obs, params)
    )

    ref_fwd, ref_bwd = icm_reference(obs, action, next_obs, params)
    assert fwd_err.shape == (B, 1) and bwd_err.shape == (B, 1)
    # Tolerance leaves headroom for MXU pass-count / accumulation-order
    # differences across TPU generations (typical agreement is ~1e-3 or better).
    assert jnp.allclose(fwd_err, ref_fwd, atol=1e-2, rtol=1e-2), \
        float(jnp.max(jnp.abs(fwd_err - ref_fwd)))
    assert jnp.allclose(bwd_err, ref_bwd, atol=1e-2, rtol=1e-2), \
        float(jnp.max(jnp.abs(bwd_err - ref_bwd)))

    print("KERNEL_OK")
</pallas_src>

<mosaic_0001>
module attributes {stable_mosaic.version = 11 : i64} {
  func.func @icm_kernel(%arg0: i32, %arg1: memref<256x16xf32, #tpu.memory_space<vmem>>, %arg2: memref<256x8xf32, #tpu.memory_space<vmem>>, %arg3: memref<256x16xf32, #tpu.memory_space<vmem>>, %arg4: memref<16x64xbf16, #tpu.memory_space<vmem>>, %arg5: memref<8x64xbf16, #tpu.memory_space<vmem>>, %arg6: memref<16x64xbf16, #tpu.memory_space<vmem>>, %arg7: memref<1x64xf32, #tpu.memory_space<vmem>>, %arg8: memref<64x24xbf16, #tpu.memory_space<vmem>>, %arg9: memref<1x24xf32, #tpu.memory_space<vmem>>, %arg10: memref<2x256xf32, #tpu.memory_space<vmem>>) attributes {dimension_semantics = [#tpu.dimension_semantics<parallel>], iteration_bounds = array<i64: 2>, scalar_prefetch = 0 : i64, scratch_operands = 0 : i64, tpu.core_type = #tpu.core_type<tc>, window_params = [{transform_indices = @transform_0, window_bounds = array<i64: 256, 16>}, {transform_indices = @transform_1, window_bounds = array<i64: 256, 8>}, {transform_indices = @transform_2, window_bounds = array<i64: 256, 16>}, {pipeline_mode = #tpu.pipeline_mode<synchronous>, transform_indices = @transform_3, window_bounds = array<i64: 16, 64>}, {pipeline_mode = #tpu.pipeline_mode<synchronous>, transform_indices = @transform_4, window_bounds = array<i64: 8, 64>}, {pipeline_mode = #tpu.pipeline_mode<synchronous>, transform_indices = @transform_5, window_bounds = array<i64: 16, 64>}, {pipeline_mode = #tpu.pipeline_mode<synchronous>, transform_indices = @transform_6, window_bounds = array<i64: 1, 64>}, {pipeline_mode = #tpu.pipeline_mode<synchronous>, transform_indices = @transform_7, window_bounds = array<i64: 64, 24>}, {pipeline_mode = #tpu.pipeline_mode<synchronous>, transform_indices = @transform_8, window_bounds = array<i64: 1, 24>}, {transform_indices = @transform_9, window_bounds = array<i64: 2, 256>}]} {
    %c0 = arith.constant 0 : index
    %c0_0 = arith.constant 0 : index
    %0 = vector.load %arg1[%c0, %c0_0] : memref<256x16xf32, #tpu.memory_space<vmem>>, vector<256x16xf32>
    %c0_1 = arith.constant 0 : index
    %c0_2 = arith.constant 0 : index
    %1 = vector.load %arg2[%c0_1, %c0_2] : memref<256x8xf32, #tpu.memory_space<vmem>>, vector<256x8xf32>
    %c0_3 = arith.constant 0 : index
    %c0_4 = arith.constant 0 : index
    %2 = vector.load %arg3[%c0_3, %c0_4] : memref<256x16xf32, #tpu.memory_space<vmem>>, vector<256x16xf32>
    %3 = arith.truncf %0 : vector<256x16xf32> to vector<256x16xbf16>
    %c0_5 = arith.constant 0 : index
    %c0_6 = arith.constant 0 : index
    %4 = vector.load %arg4[%c0_5, %c0_6] : memref<16x64xbf16, #tpu.memory_space<vmem>>, vector<16x64xbf16>
    %cst = arith.constant dense<0.000000e+00> : vector<256x64xf32>
    %5 = tpu.matmul %3, %4, %cst {dimension_numbers = #tpu.dot_dimension_numbers<[1], [0], [0], [1], [0, 0, 1, 1], [], []>} : vector<256x16xbf16>, vector<16x64xbf16>, vector<256x64xf32> -> vector<256x64xf32>
    %6 = arith.truncf %1 : vector<256x8xf32> to vector<256x8xbf16>
    %c0_7 = arith.constant 0 : index
    %c0_8 = arith.constant 0 : index
    %7 = vector.load %arg5[%c0_7, %c0_8] : memref<8x64xbf16, #tpu.memory_space<vmem>>, vector<8x64xbf16>
    %cst_9 = arith.constant dense<0.000000e+00> : vector<256x64xf32>
    %8 = tpu.matmul %6, %7, %cst_9 {dimension_numbers = #tpu.dot_dimension_numbers<[1], [0], [0], [1], [0, 0, 1, 1], [], []>} : vector<256x8xbf16>, vector<8x64xbf16>, vector<256x64xf32> -> vector<256x64xf32>
    %9 = arith.addf %5, %8 : vector<256x64xf32>
    %10 = arith.truncf %2 : vector<256x16xf32> to vector<256x16xbf16>
    %c0_10 = arith.constant 0 : index
    %c0_11 = arith.constant 0 : index
    %11 = vector.load %arg6[%c0_10, %c0_11] : memref<16x64xbf16, #tpu.memory_space<vmem>>, vector<16x64xbf16>
    %cst_12 = arith.constant dense<0.000000e+00> : vector<256x64xf32>
    %12 = tpu.matmul %10, %11, %cst_12 {dimension_numbers = #tpu.dot_dimension_numbers<[1], [0], [0], [1], [0, 0, 1, 1], [], []>} : vector<256x16xbf16>, vector<16x64xbf16>, vector<256x64xf32> -> vector<256x64xf32>
    %13 = arith.addf %9, %12 : vector<256x64xf32>
    %c0_13 = arith.constant 0 : index
    %c0_14 = arith.constant 0 : index
    %14 = vector.load %arg7[%c0_13, %c0_14] : memref<1x64xf32, #tpu.memory_space<vmem>>, vector<1x64xf32>
    %15 = vector.broadcast %14 : vector<1x64xf32> to vector<256x64xf32>
    %16 = arith.addf %13, %15 : vector<256x64xf32>
    %cst_15 = arith.constant 0.000000e+00 : f32
    %17 = vector.broadcast %cst_15 : f32 to vector<256x64xf32>
    %18 = arith.maximumf %16, %17 : vector<256x64xf32>
    %19 = arith.truncf %18 : vector<256x64xf32> to vector<256x64xbf16>
    %c0_16 = arith.constant 0 : index
    %c0_17 = arith.constant 0 : index
    %20 = vector.load %arg8[%c0_16, %c0_17] : memref<64x24xbf16, #tpu.memory_space<vmem>>, vector<64x24xbf16>
    %cst_18 = arith.constant dense<0.000000e+00> : vector<256x24xf32>
    %21 = tpu.matmul %19, %20, %cst_18 {dimension_numbers = #tpu.dot_dimension_numbers<[1], [0], [0], [1], [0, 0, 1, 1], [], []>} : vector<256x64xbf16>, vector<64x24xbf16>, vector<256x24xf32> -> vector<256x24xf32>
    %c0_19 = arith.constant 0 : index
    %c0_20 = arith.constant 0 : index
    %22 = vector.load %arg9[%c0_19, %c0_20] : memref<1x24xf32, #tpu.memory_space<vmem>>, vector<1x24xf32>
    %23 = vector.broadcast %22 : vector<1x24xf32> to vector<256x24xf32>
    %24 = arith.addf %21, %23 : vector<256x24xf32>
    %25 = tpu.iota {dimensions = array<i32: 1>} : vector<256x24xi32>
    %c16_i32 = arith.constant 16 : i32
    %26 = vector.broadcast %c16_i32 : i32 to vector<256x24xi32>
    %27 = arith.cmpi slt, %25, %26 : vector<256x24xi32>
    %28 = math.tanh %24 : vector<256x24xf32>
    %29 = arith.select %27, %24, %28 : vector<256x24xi1>, vector<256x24xf32>
    %30 = tpu.concatenate %2, %1 in 1 : vector<256x16xf32>, vector<256x8xf32> -> vector<256x24xf32>
    %31 = arith.subf %30, %29 : vector<256x24xf32>
    %32 = arith.mulf %31, %31 : vector<256x24xf32>
    %33 = tpu.iota {dimensions = array<i32: 0>} : vector<2x24xi32>
    %34 = tpu.iota {dimensions = array<i32: 1>} : vector<2x24xi32>
    %c16_i32_21 = arith.constant 16 : i32
    %35 = vector.broadcast %c16_i32_21 : i32 to vector<2x24xi32>
    %36 = arith.cmpi slt, %34, %35 : vector<2x24xi32>
    %c0_i32 = arith.constant 0 : i32
    %37 = vector.broadcast %c0_i32 : i32 to vector<2x24xi32>
    %38 = arith.cmpi eq, %33, %37 : vector<2x24xi32>
    %39 = arith.xori %36, %38 : vector<2x24xi1>
    %cst_22 = arith.constant dense<true> : vector<2x24xi1>
    %40 = arith.xori %39, %cst_22 : vector<2x24xi1>
    %cst_23 = arith.constant 1.000000e+00 : f32
    %cst_24 = arith.constant 0.000000e+00 : f32
    %41 = vector.broadcast %cst_23 : f32 to vector<2x24xf32>
    %42 = vector.broadcast %cst_24 : f32 to vector<2x24xf32>
    %43 = arith.select %40, %41, %42 : vector<2x24xi1>, vector<2x24xf32>
    %cst_25 = arith.constant dense<0.000000e+00> : vector<2x256xf32>
    %44 = tpu.matmul %43, %32, %cst_25 {dimension_numbers = #tpu.dot_dimension_numbers<[1], [1], [0], [0], [0, 0, 1, 0], [], []>} : vector<2x24xf32>, vector<256x24xf32>, vector<2x256xf32> -> vector<2x256xf32>
    %45 = math.sqrt %44 : vector<2x256xf32>
    %c0_26 = arith.constant 0 : index
    %c0_27 = arith.constant 0 : index
    %46 = vector.load %arg10[%c0_26, %c0_27] : memref<2x256xf32, #tpu.memory_space<vmem>>, vector<2x256xf32>
    tpu.vector_store %arg10[%c0_26, %c0_27], %45 {strides = array<i32>} : memref<2x256xf32, #tpu.memory_space<vmem>>, vector<2x256xf32>,
    return
  }
  func.func @transform_0(%arg0: i32) -> (i32, i32) {
    %c0_i32 = arith.constant 0 : i32
    %c0_i32_0 = arith.constant 0 : i32
    return %arg0, %c0_i32 : i32, i32
  }
  func.func @transform_1(%arg0: i32) -> (i32, i32) {
    %c0_i32 = arith.constant 0 : i32
    %c0_i32_0 = arith.constant 0 : i32
    return %arg0, %c0_i32 : i32, i32
  }
  func.func @transform_2(%arg0: i32) -> (i32, i32) {
    %c0_i32 = arith.constant 0 : i32
    %c0_i32_0 = arith.constant 0 : i32
    return %arg0, %c0_i32 : i32, i32
  }
  func.func @transform_3(%arg0: i32) -> (i32, i32) {
    %c0_i32 = arith.constant 0 : i32
    %c0_i32_0 = arith.constant 0 : i32
    %c0_i32_1 = arith.constant 0 : i32
    return %c0_i32, %c0_i32_0 : i32, i32
  }
  func.func @transform_4(%arg0: i32) -> (i32, i32) {
    %c0_i32 = arith.constant 0 : i32
    %c0_i32_0 = arith.constant 0 : i32
    %c0_i32_1 = arith.constant 0 : i32
    return %c0_i32, %c0_i32_0 : i32, i32
  }
  func.func @transform_5(%arg0: i32) -> (i32, i32) {
    %c0_i32 = arith.constant 0 : i32
    %c0_i32_0 = arith.constant 0 : i32
    %c0_i32_1 = arith.constant 0 : i32
    return %c0_i32, %c0_i32_0 : i32, i32
  }
  func.func @transform_6(%arg0: i32) -> (i32, i32) {
    %c0_i32 = arith.constant 0 : i32
    %c0_i32_0 = arith.constant 0 : i32
    %c0_i32_1 = arith.constant 0 : i32
    return %c0_i32, %c0_i32_0 : i32, i32
  }
  func.func @transform_7(%arg0: i32) -> (i32, i32) {
    %c0_i32 = arith.constant 0 : i32
    %c0_i32_0 = arith.constant 0 : i32
    %c0_i32_1 = arith.constant 0 : i32
    return %c0_i32, %c0_i32_0 : i32, i32
  }
  func.func @transform_8(%arg0: i32) -> (i32, i32) {
    %c0_i32 = arith.constant 0 : i32
    %c0_i32_0 = arith.constant 0 : i32
    %c0_i32_1 = arith.constant 0 : i32
    return %c0_i32, %c0_i32_0 : i32, i32
  }
  func.func @transform_9(%arg0: i32) -> (i32, i32) {
    %c0_i32 = arith.constant 0 : i32
    %c0_i32_0 = arith.constant 0 : i32
    return %c0_i32, %arg0 : i32, i32
  }
}

</mosaic_0001>

<llo_original>
// kernel: tpu_custom_call.1
$region0: #{tpu_custom_call.1}
  #allocation0 [shape = 'u32[]', space=smem, size = 0x4, offset = 0x4, fixed_abs, tag = 'smem constant byte address 0x4 - core index']
  #allocation1 [shape = 'u32[144,128]{1,0:T(1,128)}', space=vmem, size = 0x12000, scoped, tag = 'internal scratch']
  %s0 = inlined_call_operand.vmem [shape: f32[300,16], index: 0, kind: input, shape index: {}]
  %s1 = inlined_call_operand.vmem [shape: f32[300,8], index: 1, kind: input, shape index: {}]
  %s2 = inlined_call_operand.vmem [shape: f32[300,16], index: 2, kind: input, shape index: {}]
  %s3 = inlined_call_operand.vmem [shape: bf16[16,64], index: 3, kind: input, shape index: {}]
  %s4 = inlined_call_operand.vmem [shape: bf16[8,64], index: 4, kind: input, shape index: {}]
  %s5 = inlined_call_operand.vmem [shape: bf16[16,64], index: 5, kind: input, shape index: {}]
  %s6 = inlined_call_operand.vmem [shape: f32[1,64], index: 6, kind: input, shape index: {}]
  %s7 = inlined_call_operand.vmem [shape: bf16[64,24], index: 7, kind: input, shape index: {}]
  %s8 = inlined_call_operand.vmem [shape: f32[1,24], index: 8, kind: input, shape index: {}]
  %s9 = inlined_call_operand.hbm [shape: f32[2,300], index: 9, kind: output, shape index: {}]
  %s10 = sld [smem:[#allocation0]]
  $region69: #{tpu_custom_call.1} parent=0
    _
  %s12 = ssub.s32 1, %s10
  %s13 = scalar_select 0, %s12, %s10
  $region1: #{tpu_custom_call.1} parent=0
    #allocation2 [shape = 'u8[4096]{0}', space=vmem, size = 0x1000, scoped, tag = 'output window, operand 0']
    #allocation3 [shape = 's32[2]{0}', space=sflag, size = 0x8, scoped, tag = 'scoped memory for tpu_custom_call.1']
    %14 = vsyncpa [#allocation3], 0
    %s15 = scalar_lea.sflag [#allocation3], 1
    %16 = vsyncpa %s15, 0
    loop: start=0, step=1, limit=4
    $region2: #{tpu_custom_call.1} parent=1 // loop_pre_header
      _
    $region3: #{tpu_custom_call.1} parent=1 // loop_header
      %s18 = sphi 0, %s22
      %p19 = scmp.ge.s32.totalorder %s18, 4
      %s28 = sphi 0, %s30
      %s31 = sphi 0, %s28
      %s32 = sphi 0, %s31
      %s48 = sphi 0, %s32
      %s54 = sphi 0, %s56
      %s57 = sphi 0, %s54
      %s58 = sphi 0, %s57
      %s74 = sphi 0, %s58
      %s80 = sphi 0, %s82
      %s83 = sphi 0, %s80
      %s84 = sphi 0, %s83
      %s100 = sphi 0, %s84
      %s104 = sphi 0, %s104
      %s106 = sphi 0, %s104
      %s107 = sphi 0, %s106
      %s121 = sphi 0, %s107
      %s125 = sphi 0, %s125
      %s127 = sphi 0, %s125
      %s128 = sphi 0, %s127
      %s142 = sphi 0, %s128
      %s146 = sphi 0, %s146
      %s148 = sphi 0, %s146
      %s149 = sphi 0, %s148
      %s163 = sphi 0, %s149
      %s167 = sphi 0, %s167
      %s169 = sphi 0, %s167
      %s170 = sphi 0, %s169
      %s184 = sphi 0, %s170
      %s188 = sphi 0, %s188
      %s190 = sphi 0, %s188
      %s191 = sphi 0, %s190
      %s205 = sphi 0, %s191
      %s209 = sphi 0, %s209
      %s211 = sphi 0, %s209
      %s212 = sphi 0, %s211
      %s226 = sphi 0, %s212
      %s232 = sphi 0, %s234
      %s235 = sphi 0, %s232
      %s236 = sphi 0, %s235
      %s252 = sphi 0, %s236
    $region4: #{tpu_custom_call.1} parent=1 // loop_header_branch
      %21 = sbr.rel (%p19) target = $region8
    $region5: #{tpu_custom_call.1} parent=1 // loop_body
      %s23 = ssub.s32 %s18, 1
      %s24 = ssub.s32 %s18, 2
      %s25 = sadd.s32 %s18, 1
      %s26 = ssub.s32 %s18, %s25
      %p27 = scmp.eq.s32.totalorder %s26, 0
      %s29 = sadd.s32 %s28, 1
      %s30 = scalar_select %p27, %s28, %s29
      %p33 = pneg %p27
      %p34 = scmp.eq.s32.totalorder %s18, 1
      %p35 = por %p33, %p34
      %p36 = scmp.ne.s32.totalorder %s28, %s31
      %p37 = scmp.eq.s32.totalorder %s18, 0
      %p38 = por %p36, %p37
      %p39 = scmp.ne.s32.totalorder %s28, %s31
      %p40 = scmp.eq.s32.totalorder %s23, 1
      %p41 = por %p39, %p40
      %p42 = scmp.ne.s32.totalorder %s31, %s32
      %p43 = scmp.eq.s32.totalorder %s23, 0
      %p44 = por %p42, %p43
      %p45 = scmp.ne.s32.totalorder %s31, %s32
      %p46 = scmp.eq.s32.totalorder %s24, 1
      %p47 = por %p45, %p46
      %p49 = scmp.ne.s32.totalorder %s32, %s48
      %p50 = scmp.eq.s32.totalorder %s24, 0
      %p51 = por %p49, %p50
      %s52 = ssub.s32 %s18, %s25
      %p53 = scmp.eq.s32.totalorder %s52, 0
      %s55 = sadd.s32 %s54, 1
      %s56 = scalar_select %p53, %s54, %s55
      %p59 = pneg %p53
      %p60 = scmp.eq.s32.totalorder %s18, 1
      %p61 = por %p59, %p60
      %p62 = scmp.ne.s32.totalorder %s54, %s57
      %p63 = scmp.eq.s32.totalorder %s18, 0
      %p64 = por %p62, %p63
      %p65 = scmp.ne.s32.totalorder %s54, %s57
      %p66 = scmp.eq.s32.totalorder %s23, 1
      %p67 = por %p65, %p66
      %p68 = scmp.ne.s32.totalorder %s57, %s58
      %p69 = scmp.eq.s32.totalorder %s23, 0
      %p70 = por %p68, %p69
      %p71 = scmp.ne.s32.totalorder %s57, %s58
      %p72 = scmp.eq.s32.totalorder %s24, 1
      %p73 = por %p71, %p72
      %p75 = scmp.ne.s32.totalorder %s58, %s74
      %p76 = scmp.eq.s32.totalorder %s24, 0
      %p77 = por %p75, %p76
      %s78 = ssub.s32 %s18, %s25
      %p79 = scmp.eq.s32.totalorder %s78, 0
      %s81 = sadd.s32 %s80, 1
      %s82 = scalar_select %p79, %s80, %s81
      %p85 = pneg %p79
      %p86 = scmp.eq.s32.totalorder %s18, 1
      %p87 = por %p85, %p86
      %p88 = scmp.ne.s32.totalorder %s80, %s83
      %p89 = scmp.eq.s32.totalorder %s18, 0
      %p90 = por %p88, %p89
      %p91 = scmp.ne.s32.totalorder %s80, %s83
      %p92 = scmp.eq.s32.totalorder %s23, 1
      %p93 = por %p91, %p92
      %p94 = scmp.ne.s32.totalorder %s83, %s84
      %p95 = scmp.eq.s32.totalorder %s23, 0
      %p96 = por %p94, %p95
      %p97 = scmp.ne.s32.totalorder %s83, %s84
      %p98 = scmp.eq.s32.totalorder %s24, 1
      %p99 = por %p97, %p98
      %p101 = scmp.ne.s32.totalorder %s84, %s100
      %p102 = scmp.eq.s32.totalorder %s24, 0
      %p103 = por %p101, %p102
      %s105 = sadd.s32 %s104, 1
      %p108 = scmp.eq.s32.totalorder %s18, 1
      %p109 = scmp.ne.s32.totalorder %s104, %s106
      %p110 = scmp.eq.s32.totalorder %s18, 0
      %p111 = por %p109, %p110
      %p112 = scmp.ne.s32.totalorder %s104, %s106
      %p113 = scmp.eq.s32.totalorder %s23, 1
      %p114 = por %p112, %p113
      %p115 = scmp.ne.s32.totalorder %s106, %s107
      %p116 = scmp.eq.s32.totalorder %s23, 0
      %p117 = por %p115, %p116
      %p118 = scmp.ne.s32.totalorder %s106, %s107
      %p119 = scmp.eq.s32.totalorder %s24, 1
      %p120 = por %p118, %p119
      %p122 = scmp.ne.s32.totalorder %s107, %s121
      %p123 = scmp.eq.s32.totalorder %s24, 0
      %p124 = por %p122, %p123
      %s126 = sadd.s32 %s125, 1
      %p129 = scmp.eq.s32.totalorder %s18, 1
      %p130 = scmp.ne.s32.totalorder %s125, %s127
      %p131 = scmp.eq.s32.totalorder %s18, 0
      %p132 = por %p130, %p131
      %p133 = scmp.ne.s32.totalorder %s125, %s127
      %p134 = scmp.eq.s32.totalorder %s23, 1
      %p135 = por %p133, %p134
      %p136 = scmp.ne.s32.totalorder %s127, %s128
      %p137 = scmp.eq.s32.totalorder %s23, 0
      %p138 = por %p136, %p137
      %p139 = scmp.ne.s32.totalorder %s127, %s128
      %p140 = scmp.eq.s32.totalorder %s24, 1
      %p141 = por %p139, %p140
      %p143 = scmp.ne.s32.totalorder %s128, %s142
      %p144 = scmp.eq.s32.totalorder %s24, 0
      %p145 = por %p143, %p144
      %s147 = sadd.s32 %s146, 1
      %p150 = scmp.eq.s32.totalorder %s18, 1
      %p151 = scmp.ne.s32.totalorder %s146, %s148
      %p152 = scmp.eq.s32.totalorder %s18, 0
      %p153 = por %p151, %p152
      %p154 = scmp.ne.s32.totalorder %s146, %s148
      %p155 = scmp.eq.s32.totalorder %s23, 1
      %p156 = por %p154, %p155
      %p157 = scmp.ne.s32.totalorder %s148, %s149
      %p158 = scmp.eq.s32.totalorder %s23, 0
      %p159 = por %p157, %p158
      %p160 = scmp.ne.s32.totalorder %s148, %s149
      %p161 = scmp.eq.s32.totalorder %s24, 1
      %p162 = por %p160, %p161
      %p164 = scmp.ne.s32.totalorder %s149, %s163
      %p165 = scmp.eq.s32.totalorder %s24, 0
      %p166 = por %p164, %p165
      %s168 = sadd.s32 %s167, 1
      %p171 = scmp.eq.s32.totalorder %s18, 1
      %p172 = scmp.ne.s32.totalorder %s167, %s169
      %p173 = scmp.eq.s32.totalorder %s18, 0
      %p174 = por %p172, %p173
      %p175 = scmp.ne.s32.totalorder %s167, %s169
      %p176 = scmp.eq.s32.totalorder %s23, 1
      %p177 = por %p175, %p176
      %p178 = scmp.ne.s32.totalorder %s169, %s170
      %p179 = scmp.eq.s32.totalorder %s23, 0
      %p180 = por %p178, %p179
      %p181 = scmp.ne.s32.totalorder %s169, %s170
      %p182 = scmp.eq.s32.totalorder %s24, 1
      %p183 = por %p181, %p182
      %p185 = scmp.ne.s32.totalorder %s170, %s184
      %p186 = scmp.eq.s32.totalorder %s24, 0
      %p187 = por %p185, %p186
      %s189 = sadd.s32 %s188, 1
      %p192 = scmp.eq.s32.totalorder %s18, 1
      %p193 = scmp.ne.s32.totalorder %s188, %s190
      %p194 = scmp.eq.s32.totalorder %s18, 0
      %p195 = por %p193, %p194
      %p196 = scmp.ne.s32.totalorder %s188, %s190
      %p197 = scmp.eq.s32.totalorder %s23, 1
      %p198 = por %p196, %p197
      %p199 = scmp.ne.s32.totalorder %s190, %s191
      %p200 = scmp.eq.s32.totalorder %s23, 0
      %p201 = por %p199, %p200
      %p202 = scmp.ne.s32.totalorder %s190, %s191
      %p203 = scmp.eq.s32.totalorder %s24, 1
      %p204 = por %p202, %p203
      %p206 = scmp.ne.s32.totalorder %s191, %s205
      %p207 = scmp.eq.s32.totalorder %s24, 0
      %p208 = por %p206, %p207
      %s210 = sadd.s32 %s209, 1
      %p213 = scmp.eq.s32.totalorder %s18, 1
      %p214 = scmp.ne.s32.totalorder %s209, %s211
      %p215 = scmp.eq.s32.totalorder %s18, 0
      %p216 = por %p214, %p215
      %p217 = scmp.ne.s32.totalorder %s209, %s211
      %p218 = scmp.eq.s32.totalorder %s23, 1
      %p219 = por %p217, %p218
      %p220 = scmp.ne.s32.totalorder %s211, %s212
      %p221 = scmp.eq.s32.totalorder %s23, 0
      %p222 = por %p220, %p221
      %p223 = scmp.ne.s32.totalorder %s211, %s212
      %p224 = scmp.eq.s32.totalorder %s24, 1
      %p225 = por %p223, %p224
      %p227 = scmp.ne.s32.totalorder %s212, %s226
      %p228 = scmp.eq.s32.totalorder %s24, 0
      %p229 = por %p227, %p228
      %s230 = ssub.s32 %s18, %s25
      %p231 = scmp.eq.s32.totalorder %s230, 0
      %s233 = sadd.s32 %s232, 1
      %s234 = scalar_select %p231, %s232, %s233
      %p237 = pneg %p231
      %p238 = scmp.eq.s32.totalorder %s18, 1
      %p239 = por %p237, %p238
      %p240 = scmp.ne.s32.totalorder %s232, %s235
      %p241 = scmp.eq.s32.totalorder %s18, 0
      %p242 = por %p240, %p241
      %p243 = scmp.ne.s32.totalorder %s232, %s235
      %p244 = scmp.eq.s32.totalorder %s23, 1
      %p245 = por %p243, %p244
      %p246 = scmp.ne.s32.totalorder %s235, %s236
      %p247 = scmp.eq.s32.totalorder %s23, 0
      %p248 = por %p246, %p247
      %p249 = scmp.ne.s32.totalorder %s235, %s236
      %p250 = scmp.eq.s32.totalorder %s24, 1
      %p251 = por %p249, %p250
      %p253 = scmp.ne.s32.totalorder %s236, %s252
      %p254 = scmp.eq.s32.totalorder %s24, 0
      %p255 = por %p253, %p254
      %p256 = scmp.le.s32.totalorder 1, %s18
      %p257 = scmp.lt.s32.totalorder %s18, 3
      %p258 = pnand %p256, %p257
      %p259 = pneg %p258
      // Predicated region
      $region9: #{tpu_custom_call.1} parent=5 // pred_check
        _
      $region10: #{tpu_custom_call.1} parent=5 // pred_check_branch
        %261 = sbr.rel (%p258) target = $region12
      $region11: #{tpu_custom_call.1} parent=5 // pred_region
        %s262 = ssub.s32 %s18, 1
        // Predicated region
        $region13: #{tpu_custom_call.1} parent=11 // pred_check
          %p263 = pneg %p117
        $region14: #{tpu_custom_call.1} parent=11 // pred_check_branch
          %265 = sbr.rel (%p263) target = $region16
        $region15: #{tpu_custom_call.1} parent=11 // pred_region
          _
        $region16: #{tpu_custom_call.1} parent=11 // pred_fallthru
          _
        // Predicated region
        $region17: #{tpu_custom_call.1} parent=11 // pred_check
          %p266 = pneg %p138
        $region18: #{tpu_custom_call.1} parent=11 // pred_check_branch
          %268 = sbr.rel (%p266) target = $region20
        $region19: #{tpu_custom_call.1} parent=11 // pred_region
          _
        $region20: #{tpu_custom_call.1} parent=11 // pred_fallthru
          _
        // Predicated region
        $region21: #{tpu_custom_call.1} parent=11 // pred_check
          %p269 = pneg %p159
        $region22: #{tpu_custom_call.1} parent=11 // pred_check_branch
          %271 = sbr.rel (%p269) target = $region24
        $region23: #{tpu_custom_call.1} parent=11 // pred_region
          _
        $region24: #{tpu_custom_call.1} parent=11 // pred_fallthru
          _
        // Predicated region
        $region25: #{tpu_custom_call.1} parent=11 // pred_check
          %p272 = pneg %p180
        $region26: #{tpu_custom_call.1} parent=11 // pred_check_branch
          %274 = sbr.rel (%p272) target = $region28
        $region27: #{tpu_custom_call.1} parent=11 // pred_region
          _
        $region28: #{tpu_custom_call.1} parent=11 // pred_fallthru
          _
        // Predicated region
        $region29: #{tpu_custom_call.1} parent=11 // pred_check
          %p275 = pneg %p201
        $region30: #{tpu_custom_call.1} parent=11 // pred_check_branch
          %277 = sbr.rel (%p275) target = $region32
        $region31: #{tpu_custom_call.1} parent=11 // pred_region
          _
        $region32: #{tpu_custom_call.1} parent=11 // pred_fallthru
          _
        // Predicated region
        $region33: #{tpu_custom_call.1} parent=11 // pred_check
          %p278 = pneg %p222
        $region34: #{tpu_custom_call.1} parent=11 // pred_check_branch
          %280 = sbr.rel (%p278) target = $region36
        $region35: #{tpu_custom_call.1} parent=11 // pred_region
          _
        $region36: #{tpu_custom_call.1} parent=11 // pred_fallthru
          _
      $region12: #{tpu_custom_call.1} parent=5 // pred_fallthru
        _
      %p281 = scmp.lt.s32.totalorder %s18, 2
      // Predicated region
      $region37: #{tpu_custom_call.1} parent=5 // pred_check
        %p282 = pneg %p281
      $region38: #{tpu_custom_call.1} parent=5 // pred_check_branch
        %284 = sbr.rel (%p282) target = $region40
      $region39: #{tpu_custom_call.1} parent=5 // pred_region
        // Predicated region
        $region41: #{tpu_custom_call.1} parent=39 // pred_check
          %p285 = pneg %p38
        $region42: #{tpu_custom_call.1} parent=39 // pred_check_branch
          %287 = sbr.rel (%p285) target = $region44
        $region43: #{tpu_custom_call.1} parent=39 // pred_region
          %s288 = smul.u32 32, %s18
          %s289 = ssub.s32 38, %s288
          %p290 = scmp.lt.s32.totalorder %s289, 32
          %s291 = scalar_select %p290, %s289, 32
          %s292 = smul.u32 128, %s291
          %p293 = scmp.lt.s32.totalorder %s288, 37
          %s294 = scalar_select %p293, %s288, 37
          %s295 = smul.addr %s294, 8
          %s296 = scalar_lea.vmem %s0, %s295
          %s297 = smul.u32 32, %s18
          %s298 = ssub.s32 38, %s297
          %p299 = scmp.lt.s32.totalorder %s298, 32
          %s300 = scalar_select %p299, %s298, 32
          %s301 = smul.u32 128, %s300
        $region44: #{tpu_custom_call.1} parent=39 // pred_fallthru
          _
        // Predicated region
        $region45: #{tpu_custom_call.1} parent=39 // pred_check
          %p302 = pneg %p64
        $region46: #{tpu_custom_call.1} parent=39 // pred_check_branch
          %304 = sbr.rel (%p302) target = $region48
        $region47: #{tpu_custom_call.1} parent=39 // pred_region
          %s305 = smul.u32 32, %s18
          %s306 = ssub.s32 38, %s305
          %p307 = scmp.lt.s32.totalorder %s306, 32
          %s308 = scalar_select %p307, %s306, 32
          %s309 = smul.u32 128, %s308
          %p310 = scmp.lt.s32.totalorder %s305, 37
          %s311 = scalar_select %p310, %s305, 37
          %s312 = smul.addr %s311, 8
          %s313 = scalar_lea.vmem %s1, %s312
          %s314 = smul.u32 32, %s18
          %s315 = ssub.s32 38, %s314
          %p316 = scmp.lt.s32.totalorder %s315, 32
          %s317 = scalar_select %p316, %s315, 32
          %s318 = smul.u32 128, %s317
        $region48: #{tpu_custom_call.1} parent=39 // pred_fallthru
          _
        // Predicated region
        $region49: #{tpu_custom_call.1} parent=39 // pred_check
          %p319 = pneg %p90
        $region50: #{tpu_custom_call.1} parent=39 // pred_check_branch
          %321 = sbr.rel (%p319) target = $region52
        $region51: #{tpu_custom_call.1} parent=39 // pred_region
          %s322 = smul.u32 32, %s18
          %s323 = ssub.s32 38, %s322
          %p324 = scmp.lt.s32.totalorder %s323, 32
          %s325 = scalar_select %p324, %s323, 32
          %s326 = smul.u32 128, %s325
          %p327 = scmp.lt.s32.totalorder %s322, 37
          %s328 = scalar_select %p327, %s322, 37
          %s329 = smul.addr %s328, 8
          %s330 = scalar_lea.vmem %s2, %s329
          %s331 = smul.u32 32, %s18
          %s332 = ssub.s32 38, %s331
          %p333 = scmp.lt.s32.totalorder %s332, 32
          %s334 = scalar_select %p333, %s332, 32
          %s335 = smul.u32 128, %s334
        $region52: #{tpu_custom_call.1} parent=39 // pred_fallthru
          _
      $region40: #{tpu_custom_call.1} parent=5 // pred_fallthru
        _
      %p336 = scmp.le.s32.totalorder 1, %s18
      %p337 = scmp.lt.s32.totalorder %s18, 3
      %p338 = pnand %p336, %p337
      %p339 = pneg %p338
      // Predicated region
      $region53: #{tpu_custom_call.1} parent=5 // pred_check
        _
      $region54: #{tpu_custom_call.1} parent=5 // pred_check_branch
        %341 = sbr.rel (%p338) target = $region56
      $region55: #{tpu_custom_call.1} parent=5 // pred_region
        %s342 = ssub.s32 %s18, 1
        %s343 = smul.u32 32, %s23
        %s344 = ssub.s32 38, %s343
        %p345 = scmp.lt.s32.totalorder %s344, 32
        %s346 = scalar_select %p345, %s344, 32
        %s347 = smul.u32 128, %s346
        %p348 = scmp.lt.s32.totalorder %s343, 37
        %s349 = scalar_select %p348, %s343, 37
        %s350 = smul.addr %s349, 8
        %s351 = scalar_lea.vmem %s0, %s350
        %p352 = pneg %p44
        %p353 = pneg %p41
        %s354 = smul.u32 32, %s23
        %s355 = ssub.s32 38, %s354
        %p356 = scmp.lt.s32.totalorder %s355, 32
        %s357 = scalar_select %p356, %s355, 32
        %s358 = smul.u32 128, %s357
        %p359 = scmp.lt.s32.totalorder %s354, 37
        %s360 = scalar_select %p359, %s354, 37
        %s361 = smul.addr %s360, 8
        %s362 = scalar_lea.vmem %s1, %s361
        %p363 = pneg %p70
        %p364 = pneg %p67
        %s365 = smul.u32 32, %s23
        %s366 = ssub.s32 38, %s365
        %p367 = scmp.lt.s32.totalorder %s366, 32
        %s368 = scalar_select %p367, %s366, 32
        %s369 = smul.u32 128, %s368
        %p370 = scmp.lt.s32.totalorder %s365, 37
        %s371 = scalar_select %p370, %s365, 37
        %s372 = smul.addr %s371, 8
        %s373 = scalar_lea.vmem %s2, %s372
        %p374 = pneg %p96
        %p375 = pneg %p93
        %p376 = pneg %p117
        %p377 = pneg %p114
        %p378 = pneg %p138
        %p379 = pneg %p135
        %p380 = pneg %p159
        %p381 = pneg %p156
        %p382 = pneg %p180
        %p383 = pneg %p177
        %p384 = pneg %p201
        %p385 = pneg %p198
        %p386 = pneg %p222
        %p387 = pneg %p219
        %p388 = pneg %p248
        %p389 = pneg %p245
        %s390 = sand.u32 %s235, 1
        %s391 = scalar_lea.sflag [#allocation3], %s390
        %s392 = sand.u32 %s235, 1
        %s393 = smul.addr %s392, 4
        %s394 = scalar_lea.vmem [#allocation2], %s393
        %s395 = smul.u32 32, %s23
        %s396 = ssub.s32 38, %s395
        %p397 = scmp.lt.s32.totalorder %s396, 32
        %s398 = scalar_select %p397, %s396, 32
        %s399 = smul.u32 128, %s398
        %p400 = scmp.lt.s32.totalorder %s395, 37
        %s401 = scalar_select %p400, %s395, 37
        %s402 = smul.addr %s401, 8
        %s403 = scalar_lea.vmem %s0, %s402
        %s404 = smul.u32 32, %s23
        %s405 = ssub.s32 38, %s404
        %p406 = scmp.lt.s32.totalorder %s405, 32
        %s407 = scalar_select %p406, %s405, 32
        %s408 = smul.u32 128, %s407
        %s409 = smul.u32 32, %s23
        %s410 = ssub.s32 38, %s409
        %p411 = scmp.lt.s32.totalorder %s410, 32
        %s412 = scalar_select %p411, %s410, 32
        %s413 = smul.u32 128, %s412
        %p414 = scmp.lt.s32.totalorder %s409, 37
        %s415 = scalar_select %p414, %s409, 37
        %s416 = smul.addr %s415, 8
        %s417 = scalar_lea.vmem %s1, %s416
        %s418 = smul.u32 32, %s23
        %s419 = ssub.s32 38, %s418
        %p420 = scmp.lt.s32.totalorder %s419, 32
        %s421 = scalar_select %p420, %s419, 32
        %s422 = smul.u32 128, %s421
        %s423 = smul.u32 32, %s23
        %s424 = ssub.s32 38, %s423
        %p425 = scmp.lt.s32.totalorder %s424, 32
        %s426 = scalar_select %p425, %s424, 32
        %s427 = smul.u32 128, %s426
        %p428 = scmp.lt.s32.totalorder %s423, 37
        %s429 = scalar_select %p428, %s423, 37
        %s430 = smul.addr %s429, 8
        %s431 = scalar_lea.vmem %s2, %s430
        %s432 = smul.u32 32, %s23
        %s433 = ssub.s32 38, %s432
        %p434 = scmp.lt.s32.totalorder %s433, 32
        %s435 = scalar_select %p434, %s433, 32
        %s436 = smul.u32 128, %s435
        %s437 = smul.u32 2, %s23
        %s438 = ssub.s32 3, %s437
        %p439 = scmp.lt.s32.totalorder %s438, 2
        %s440 = scalar_select %p439, %s438, 2
        %s441 = smul.u32 32, %s440
        %v443 = vld [vmem:[%s403] sm:$0xff]
        %v444 = vld [vmem:[%s403 + $0x8] sm:$0xff]
        %v445 = vld [vmem:[%s403 + $0x10] sm:$0xff]
        %v446 = vld [vmem:[%s403 + $0x18] sm:$0xff]
        %v447 = vld [vmem:[%s403 + $0x20] sm:$0xff]
        %v448 = vld [vmem:[%s403 + $0x28] sm:$0xff]
        %v449 = vld [vmem:[%s403 + $0x30] sm:$0xff]
        %v450 = vld [vmem:[%s403 + $0x38] sm:$0xff]
        %v451 = vld [vmem:[%s403 + $0x40] sm:$0xff]
        %v452 = vld [vmem:[%s403 + $0x48] sm:$0xff]
        %v453 = vld [vmem:[%s403 + $0x50] sm:$0xff]
        %v454 = vld [vmem:[%s403 + $0x58] sm:$0xff]
        %v455 = vld [vmem:[%s403 + $0x60] sm:$0xff]
        %v456 = vld [vmem:[%s403 + $0x68] sm:$0xff]
        %v457 = vld [vmem:[%s403 + $0x70] sm:$0xff]
        %v458 = vld [vmem:[%s403 + $0x78] sm:$0xff]
        %v459 = vld [vmem:[%s403 + $0x80] sm:$0xff]
        %v460 = vld [vmem:[%s403 + $0x88] sm:$0xff]
        %v461 = vld [vmem:[%s403 + $0x90] sm:$0xff]
        %v462 = vld [vmem:[%s403 + $0x98] sm:$0xff]
        %v463 = vld [vmem:[%s403 + $0xa0] sm:$0xff]
        %v464 = vld [vmem:[%s403 + $0xa8] sm:$0xff]
        %v465 = vld [vmem:[%s403 + $0xb0] sm:$0xff]
        %v466 = vld [vmem:[%s403 + $0xb8] sm:$0xff]
        %v467 = vld [vmem:[%s403 + $0xc0] sm:$0xff]
        %v468 = vld [vmem:[%s403 + $0xc8] sm:$0xff]
        %v469 = vld [vmem:[%s403 + $0xd0] sm:$0xff]
        %v470 = vld [vmem:[%s403 + $0xd8] sm:$0xff]
        %v471 = vld [vmem:[%s403 + $0xe0] sm:$0xff]
        %v472 = vld [vmem:[%s403 + $0xe8] sm:$0xff]
        %v473 = vld [vmem:[%s403 + $0xf0] sm:$0xff]
        %v474 = vld [vmem:[%s403 + $0xf8] sm:$0xff]
        %v475 = vld [vmem:[%s417] sm:$0xff]
        %v476 = vld [vmem:[%s417 + $0x8] sm:$0xff]
        %v477 = vld [vmem:[%s417 + $0x10] sm:$0xff]
        %v478 = vld [vmem:[%s417 + $0x18] sm:$0xff]
        %v479 = vld [vmem:[%s417 + $0x20] sm:$0xff]
        %v480 = vld [vmem:[%s417 + $0x28] sm:$0xff]
        %v481 = vld [vmem:[%s417 + $0x30] sm:$0xff]
        %v482 = vld [vmem:[%s417 + $0x38] sm:$0xff]
        %v483 = vld [vmem:[%s417 + $0x40] sm:$0xff]
        %v484 = vld [vmem:[%s417 + $0x48] sm:$0xff]
        %v485 = vld [vmem:[%s417 + $0x50] sm:$0xff]
        %v486 = vld [vmem:[%s417 + $0x58] sm:$0xff]
        %v487 = vld [vmem:[%s417 + $0x60] sm:$0xff]
        %v488 = vld [vmem:[%s417 + $0x68] sm:$0xff]
        %v489 = vld [vmem:[%s417 + $0x70] sm:$0xff]
        %v490 = vld [vmem:[%s417 + $0x78] sm:$0xff]
        %v491 = vld [vmem:[%s417 + $0x80] sm:$0xff]
        %v492 = vld [vmem:[%s417 + $0x88] sm:$0xff]
        %v493 = vld [vmem:[%s417 + $0x90] sm:$0xff]
        %v494 = vld [vmem:[%s417 + $0x98] sm:$0xff]
        %v495 = vld [vmem:[%s417 + $0xa0] sm:$0xff]
        %v496 = vld [vmem:[%s417 + $0xa8] sm:$0xff]
        %v497 = vld [vmem:[%s417 + $0xb0] sm:$0xff]
        %v498 = vld [vmem:[%s417 + $0xb8] sm:$0xff]
        %v499 = vld [vmem:[%s417 + $0xc0] sm:$0xff]
        %v500 = vld [vmem:[%s417 + $0xc8] sm:$0xff]
        %v501 = vld [vmem:[%s417 + $0xd0] sm:$0xff]
        %v502 = vld [vmem:[%s417 + $0xd8] sm:$0xff]
        %v503 = vld [vmem:[%s417 + $0xe0] sm:$0xff]
        %v504 = vld [vmem:[%s417 + $0xe8] sm:$0xff]
        %v505 = vld [vmem:[%s417 + $0xf0] sm:$0xff]
        %v506 = vld [vmem:[%s417 + $0xf8] sm:$0xff]
        %v507 = vld [vmem:[%s431] sm:$0xff]
        %v508 = vld [vmem:[%s431 + $0x8] sm:$0xff]
        %v509 = vld [vmem:[%s431 + $0x10] sm:$0xff]
        %v510 = vld [vmem:[%s431 + $0x18] sm:$0xff]
        %v511 = vld [vmem:[%s431 + $0x20] sm:$0xff]
        %v512 = vld [vmem:[%s431 + $0x28] sm:$0xff]
        %v513 = vld [vmem:[%s431 + $0x30] sm:$0xff]
        %v514 = vld [vmem:[%s431 + $0x38] sm:$0xff]
        %v515 = vld [vmem:[%s431 + $0x40] sm:$0xff]
        %v516 = vld [vmem:[%s431 + $0x48] sm:$0xff]
        %v517 = vld [vmem:[%s431 + $0x50] sm:$0xff]
        %v518 = vld [vmem:[%s431 + $0x58] sm:$0xff]
        %v519 = vld [vmem:[%s431 + $0x60] sm:$0xff]
        %v520 = vld [vmem:[%s431 + $0x68] sm:$0xff]
        %v521 = vld [vmem:[%s431 + $0x70] sm:$0xff]
        %v522 = vld [vmem:[%s431 + $0x78] sm:$0xff]
        %v523 = vld [vmem:[%s431 + $0x80] sm:$0xff]
        %v524 = vld [vmem:[%s431 + $0x88] sm:$0xff]
        %v525 = vld [vmem:[%s431 + $0x90] sm:$0xff]
        %v526 = vld [vmem:[%s431 + $0x98] sm:$0xff]
        %v527 = vld [vmem:[%s431 + $0xa0] sm:$0xff]
        %v528 = vld [vmem:[%s431 + $0xa8] sm:$0xff]
        %v529 = vld [vmem:[%s431 + $0xb0] sm:$0xff]
        %v530 = vld [vmem:[%s431 + $0xb8] sm:$0xff]
        %v531 = vld [vmem:[%s431 + $0xc0] sm:$0xff]
        %v532 = vld [vmem:[%s431 + $0xc8] sm:$0xff]
        %v533 = vld [vmem:[%s431 + $0xd0] sm:$0xff]
        %v534 = vld [vmem:[%s431 + $0xd8] sm:$0xff]
        %v535 = vld [vmem:[%s431 + $0xe0] sm:$0xff]
        %v536 = vld [vmem:[%s431 + $0xe8] sm:$0xff]
        %v537 = vld [vmem:[%s431 + $0xf0] sm:$0xff]
        %v538 = vld [vmem:[%s431 + $0xf8] sm:$0xff]
        %v539 = vpack.c.bf16 %v444, %v443
        %v540 = vpack.c.bf16 %v446, %v445
        %v541 = vpack.c.bf16 %v448, %v447
        %v542 = vpack.c.bf16 %v450, %v449
        %v543 = vpack.c.bf16 %v452, %v451
        %v544 = vpack.c.bf16 %v454, %v453
        %v545 = vpack.c.bf16 %v456, %v455
        %v546 = vpack.c.bf16 %v458, %v457
        %v547 = vpack.c.bf16 %v460, %v459
        %v548 = vpack.c.bf16 %v462, %v461
        %v549 = vpack.c.bf16 %v464, %v463
        %v550 = vpack.c.bf16 %v466, %v465
        %v551 = vpack.c.bf16 %v468, %v467
        %v552 = vpack.c.bf16 %v470, %v469
        %v553 = vpack.c.bf16 %v472, %v471
        %v554 = vpack.c.bf16 %v474, %v473
        %v555 = vld [vmem:[%s3] sm:$0xf]
        %v556 = vld [vmem:[%s3 + $0x4] sm:$0xf]
        %v557 = vpack.c.bf16 %v476, %v475
        %v558 = vpack.c.bf16 %v478, %v477
        %v559 = vpack.c.bf16 %v480, %v479
        %v560 = vpack.c.bf16 %v482, %v481
        %v561 = vpack.c.bf16 %v484, %v483
        %v562 = vpack.c.bf16 %v486, %v485
        %v563 = vpack.c.bf16 %v488, %v487
        %v564 = vpack.c.bf16 %v490, %v489
        %v565 = vpack.c.bf16 %v492, %v491
        %v566 = vpack.c.bf16 %v494, %v493
        %v567 = vpack.c.bf16 %v496, %v495
        %v568 = vpack.c.bf16 %v498, %v497
        %v569 = vpack.c.bf16 %v500, %v499
        %v570 = vpack.c.bf16 %v502, %v501
        %v571 = vpack.c.bf16 %v504, %v503
        %v572 = vpack.c.bf16 %v506, %v505
        %v573 = vld [vmem:[%s4] sm:$0xf]
        %vm574 = vcmask 64512
        %v576 = vsel %vm574, %v557, 0
        %v579 = vsel %vm574, %v558, 0
        %v582 = vsel %vm574, %v559, 0
        %v585 = vsel %vm574, %v560, 0
        %v588 = vsel %vm574, %v561, 0
        %v591 = vsel %vm574, %v562, 0
        %v594 = vsel %vm574, %v563, 0
        %v597 = vsel %vm574, %v564, 0
        %v600 = vsel %vm574, %v565, 0
        %v603 = vsel %vm574, %v566, 0
        %v606 = vsel %vm574, %v567, 0
        %v609 = vsel %vm574, %v568, 0
        %v612 = vsel %vm574, %v569, 0
        %v615 = vsel %vm574, %v570, 0
        %v618 = vsel %vm574, %v571, 0
        %v621 = vsel %vm574, %v572, 0
        %vm623 = vcmask 1043456
        %v625 = vsel %vm623, %v573, 0
        %627 = vmatprep.subr.bf16.mxu0 0
        %628 = vmatpush1.bf16.msra.mxu0 %v625
        %629 = vmatprep.subr.bf16.mxu0 0
        %630 = vmatpush1.bf16.msra.mxu0 0
        %631 = vmatprep.subr.bf16.mxu0 0
        %632 = vmatpush1.bf16.msra.mxu0 0
        %633 = vmatprep.subr.bf16.mxu0 0
        %634 = vmatpush1.bf16.msra.mxu0 0
        %635 = vmatprep.subr.bf16.mxu0 0
        %636 = vmatpush1.bf16.msra.mxu0 0
        %637 = vmatprep.subr.bf16.mxu0 0
        %638 = vmatpush1.bf16.msra.mxu0 0
        %639 = vmatprep.subr.bf16.mxu0 0
        %640 = vmatpush1.bf16.msra.mxu0 0
        %641 = vmatprep.subr.bf16.mxu0 0
        %642 = vmatpush1.bf16.msra.mxu0 0
        %643 = vmatprep.subr.bf16.mxu0 0
        %644 = vmatpush1.bf16.msra.mxu0 0
        %645 = vmatprep.subr.bf16.mxu0 0
        %646 = vmatpush1.bf16.msra.mxu0 0
        %647 = vmatprep.subr.bf16.mxu0 0
        %648 = vmatpush1.bf16.msra.mxu0 0
        %649 = vmatprep.subr.bf16.mxu0 0
        %650 = vmatpush1.bf16.msra.mxu0 0
        %651 = vmatprep.subr.bf16.mxu0 0
        %652 = vmatpush1.bf16.msra.mxu0 0
        %653 = vmatprep.subr.bf16.mxu0 0
        %654 = vmatpush1.bf16.msra.mxu0 0
        %655 = vmatprep.subr.bf16.mxu0 0
        %656 = vmatpush1.bf16.msra.mxu0 0
        %657 = vmatprep.subr.bf16.mxu0 0
        %658 = vmatpush1.bf16.msra.mxu0 0
        %659 = vmatprep.mubr.bf16.mxu0 0
        %660 = vmatmul.mubr.bf16.gmra.mrb[0].mxu0 %v576
        %v661 = vpop.f32.mrb[0].mxu0
        %v662 = vadd.f32 0.0, %v661
        %v663 = vpop.f32.mrb[0].mxu0
        %v664 = vpop.f32.mrb[0].mxu0
        %v665 = vadd.f32 0.0, %v664
        %v666 = vpop.f32.mrb[0].mxu0
        %667 = vmatprep.mubr.bf16.mxu0 0
        %668 = vmatmul.mubr.bf16.gmra.mrb[0].mxu0 %v579
        %v669 = vpop.f32.mrb[0].mxu0
        %v670 = vadd.f32 0.0, %v669
        %v671 = vpop.f32.mrb[0].mxu0
        %v672 = vpop.f32.mrb[0].mxu0
        %v673 = vadd.f32 0.0, %v672
        %v674 = vpop.f32.mrb[0].mxu0
        %675 = vmatprep.mubr.bf16.mxu0 0
        %676 = vmatmul.mubr.bf16.gmra.mrb[0].mxu0 %v582
        %v677 = vpop.f32.mrb[0].mxu0
        %v678 = vadd.f32 0.0, %v677
        %v679 = vpop.f32.mrb[0].mxu0
        %v680 = vpop.f32.mrb[0].mxu0
        %v681 = vadd.f32 0.0, %v680
        %v682 = vpop.f32.mrb[0].mxu0
        %683 = vmatprep.mubr.bf16.mxu0 0
        %684 = vmatmul.mubr.bf16.gmra.mrb[0].mxu0 %v585
        %v685 = vpop.f32.mrb[0].mxu0
        %v686 = vadd.f32 0.0, %v685
        %v687 = vpop.f32.mrb[0].mxu0
        %v688 = vpop.f32.mrb[0].mxu0
        %v689 = vadd.f32 0.0, %v688
        %v690 = vpop.f32.mrb[0].mxu0
        %691 = vmatprep.mubr.bf16.mxu0 0
        %692 = vmatmul.mubr.bf16.gmra.mrb[0].mxu0 %v588
        %v693 = vpop.f32.mrb[0].mxu0
        %v694 = vadd.f32 0.0, %v693
        %v695 = vpop.f32.mrb[0].mxu0
        %v696 = vpop.f32.mrb[0].mxu0
        %v697 = vadd.f32 0.0, %v696
        %v698 = vpop.f32.mrb[0].mxu0
        %699 = vmatprep.mubr.bf16.mxu0 0
        %700 = vmatmul.mubr.bf16.gmra.mrb[0].mxu0 %v591
        %v701 = vpop.f32.mrb[0].mxu0
        %v702 = vadd.f32 0.0, %v701
        %v703 = vpop.f32.mrb[0].mxu0
        %v704 = vpop.f32.mrb[0].mxu0
        %v705 = vadd.f32 0.0, %v704
        %v706 = vpop.f32.mrb[0].mxu0
        %707 = vmatprep.mubr.bf16.mxu0 0
        %708 = vmatmul.mubr.bf16.gmra.mrb[0].mxu0 %v594
        %v709 = vpop.f32.mrb[0].mxu0
        %v710 = vadd.f32 0.0, %v709
        %v711 = vpop.f32.mrb[0].mxu0
        %v712 = vpop.f32.mrb[0].mxu0
        %v713 = vadd.f32 0.0, %v712
        %v714 = vpop.f32.mrb[0].mxu0
        %715 = vmatprep.mubr.bf16.mxu0 0
        %716 = vmatmul.mubr.bf16.gmra.mrb[0].mxu0 %v597
        %v717 = vpop.f32.mrb[0].mxu0
        %v718 = vadd.f32 0.0, %v717
        %v719 = vpop.f32.mrb[0].mxu0
        %v720 = vpop.f32.mrb[0].mxu0
        %v721 = vadd.f32 0.0, %v720
        %v722 = vpop.f32.mrb[0].mxu0
        %723 = vmatprep.mubr.bf16.mxu0 0
        %724 = vmatmul.mubr.bf16.gmra.mrb[0].mxu0 %v600
        %v725 = vpop.f32.mrb[0].mxu0
        %v726 = vadd.f32 0.0, %v725
        %v727 = vpop.f32.mrb[0].mxu0
        %v728 = vpop.f32.mrb[0].mxu0
        %v729 = vadd.f32 0.0, %v728
        %v730 = vpop.f32.mrb[0].mxu0
        %731 = vmatprep.mubr.bf16.mxu0 0
        %732 = vmatmul.mubr.bf16.gmra.mrb[0].mxu0 %v603
        %v733 = vpop.f32.mrb[0].mxu0
        %v734 = vadd.f32 0.0, %v733
        %v735 = vpop.f32.mrb[0].mxu0
        %v736 = vpop.f32.mrb[0].mxu0
        %v737 = vadd.f32 0.0, %v736
        %v738 = vpop.f32.mrb[0].mxu0
        %739 = vmatprep.mubr.bf16.mxu0 0
        %740 = vmatmul.mubr.bf16.gmra.mrb[0].mxu0 %v606
        %v741 = vpop.f32.mrb[0].mxu0
        %v742 = vadd.f32 0.0, %v741
        %v743 = vpop.f32.mrb[0].mxu0
        %v744 = vpop.f32.mrb[0].mxu0
        %v745 = vadd.f32 0.0, %v744
        %v746 = vpop.f32.mrb[0].mxu0
        %747 = vmatprep.mubr.bf16.mxu0 0
        %748 = vmatmul.mubr.bf16.gmra.mrb[0].mxu0 %v609
        %v749 = vpop.f32.mrb[0].mxu0
        %v750 = vadd.f32 0.0, %v749
        %v751 = vpop.f32.mrb[0].mxu0
        %v752 = vpop.f32.mrb[0].mxu0
        %v753 = vadd.f32 0.0, %v752
        %v754 = vpop.f32.mrb[0].mxu0
        %755 = vmatprep.mubr.bf16.mxu0 0
        %756 = vmatmul.mubr.bf16.gmra.mrb[0].mxu0 %v612
        %v757 = vpop.f32.mrb[0].mxu0
        %v758 = vadd.f32 0.0, %v757
        %v759 = vpop.f32.mrb[0].mxu0
        %v760 = vpop.f32.mrb[0].mxu0
        %v761 = vadd.f32 0.0, %v760
        %v762 = vpop.f32.mrb[0].mxu0
        %763 = vmatprep.mubr.bf16.mxu0 0
        %764 = vmatmul.mubr.bf16.gmra.mrb[0].mxu0 %v615
        %v765 = vpop.f32.mrb[0].mxu0
        %v766 = vadd.f32 0.0, %v765
        %v767 = vpop.f32.mrb[0].mxu0
        %v768 = vpop.f32.mrb[0].mxu0
        %v769 = vadd.f32 0.0, %v768
        %v770 = vpop.f32.mrb[0].mxu0
        %771 = vmatprep.mubr.bf16.mxu0 0
        %772 = vmatmul.mubr.bf16.gmra.mrb[0].mxu0 %v618
        %v773 = vpop.f32.mrb[0].mxu0
        %v774 = vadd.f32 0.0, %v773
        %v775 = vpop.f32.mrb[0].mxu0
        %v776 = vpop.f32.mrb[0].mxu0
        %v777 = vadd.f32 0.0, %v776
        %v778 = vpop.f32.mrb[0].mxu0
        %779 = vmatprep.mubr.bf16.mxu0 0
        %780 = vmatmul.mubr.bf16.gmra.mrb[0].mxu0 %v621
        %v781 = vpop.f32.mrb[0].mxu0
        %v782 = vadd.f32 0.0, %v781
        %v783 = vpop.f32.mrb[0].mxu0
        %v784 = vpop.f32.mrb[0].mxu0
        %v785 = vadd.f32 0.0, %v784
        %v786 = vpop.f32.mrb[0].mxu0
        %787 = vdwg.mxu0
        %v790 = vunpack.c.l.b16 %v555
        %v791 = vunpack.c.l.b16 %v556
        %v792 = vpack.c.b16 %v791, %v790
        %vm794 = vcmask 130048
        %v796 = vsel %vm794, %v539, 0
        %v799 = vsel %vm794, %v540, 0
        %v802 = vsel %vm794, %v541, 0
        %v805 = vsel %vm794, %v542, 0
        %v808 = vsel %vm794, %v543, 0
        %v811 = vsel %vm794, %v544, 0
        %v814 = vsel %vm794, %v545, 0
        %v817 = vsel %vm794, %v546, 0
        %v820 = vsel %vm794, %v547, 0
        %v823 = vsel %vm794, %v548, 0
        %v826 = vsel %vm794, %v549, 0
        %v829 = vsel %vm794, %v550, 0
        %v832 = vsel %vm794, %v551, 0
        %v835 = vsel %vm794, %v552, 0
        %v838 = vsel %vm794, %v553, 0
        %v841 = vsel %vm794, %v554, 0
        %843 = vmatprep.subr.bf16.mxu0 0
        %844 = vmatpush1.bf16.msra.mxu0 %v792
        %845 = vmatprep.subr.bf16.mxu0 0
        %846 = vmatpush1.bf16.msra.mxu0 0
        %847 = vmatprep.subr.bf16.mxu0 0
        %848 = vmatpush1.bf16.msra.mxu0 0
        %849 = vmatprep.subr.bf16.mxu0 0
        %850 = vmatpush1.bf16.msra.mxu0 0
        %851 = vmatprep.subr.bf16.mxu0 0
        %852 = vmatpush1.bf16.msra.mxu0 0
        %853 = vmatprep.subr.bf16.mxu0 0
        %854 = vmatpush1.bf16.msra.mxu0 0
        %855 = vmatprep.subr.bf16.mxu0 0
        %856 = vmatpush1.bf16.msra.mxu0 0
        %857 = vmatprep.subr.bf16.mxu0 0
        %858 = vmatpush1.bf16.msra.mxu0 0
        %859 = vmatprep.subr.bf16.mxu0 0
        %860 = vmatpush1.bf16.msra.mxu0 0
        %861 = vmatprep.subr.bf16.mxu0 0
        %862 = vmatpush1.bf16.msra.mxu0 0
        %863 = vmatprep.subr.bf16.mxu0 0
        %864 = vmatpush1.bf16.msra.mxu0 0
        %865 = vmatprep.subr.bf16.mxu0 0
        %866 = vmatpush1.bf16.msra.mxu0 0
        %867 = vmatprep.subr.bf16.mxu0 0
        %868 = vmatpush1.bf16.msra.mxu0 0
        %869 = vmatprep.subr.bf16.mxu0 0
        %870 = vmatpush1.bf16.msra.mxu0 0
        %871 = vmatprep.subr.bf16.mxu0 0
        %872 = vmatpush1.bf16.msra.mxu0 0
        %873 = vmatprep.subr.bf16.mxu0 0
        %874 = vmatpush1.bf16.msra.mxu0 0
        %875 = vmatprep.mubr.bf16.mxu0 0
        %876 = vmatmul.mubr.bf16.gmra.mrb[0].mxu0 %v796
        %v877 = vpop.f32.mrb[0].mxu0
        %v878 = vadd.f32 %v662, %v877
        %v879 = vpop.f32.mrb[0].mxu0
        %v880 = vpop.f32.mrb[0].mxu0
        %v881 = vadd.f32 %v665, %v880
        %v882 = vpop.f32.mrb[0].mxu0
        %883 = vmatprep.mubr.bf16.mxu0 0
        %884 = vmatmul.mubr.bf16.gmra.mrb[0].mxu0 %v799
        %v885 = vpop.f32.mrb[0].mxu0
        %v886 = vadd.f32 %v670, %v885
        %v887 = vpop.f32.mrb[0].mxu0
        %v888 = vpop.f32.mrb[0].mxu0
        %v889 = vadd.f32 %v673, %v888
        %v890 = vpop.f32.mrb[0].mxu0
        %891 = vmatprep.mubr.bf16.mxu0 0
        %892 = vmatmul.mubr.bf16.gmra.mrb[0].mxu0 %v802
        %v893 = vpop.f32.mrb[0].mxu0
        %v894 = vadd.f32 %v678, %v893
        %v895 = vpop.f32.mrb[0].mxu0
        %v896 = vpop.f32.mrb[0].mxu0
        %v897 = vadd.f32 %v681, %v896
        %v898 = vpop.f32.mrb[0].mxu0
        %899 = vmatprep.mubr.bf16.mxu0 0
        %900 = vmatmul.mubr.bf16.gmra.mrb[0].mxu0 %v805
        %v901 = vpop.f32.mrb[0].mxu0
        %v902 = vadd.f32 %v686, %v901
        %v903 = vpop.f32.mrb[0].mxu0
        %v904 = vpop.f32.mrb[0].mxu0
        %v905 = vadd.f32 %v689, %v904
        %v906 = vpop.f32.mrb[0].mxu0
        %907 = vmatprep.mubr.bf16.mxu0 0
        %908 = vmatmul.mubr.bf16.gmra.mrb[0].mxu0 %v808
        %v909 = vpop.f32.mrb[0].mxu0
        %v910 = vadd.f32 %v694, %v909
        %v911 = vpop.f32.mrb[0].mxu0
        %v912 = vpop.f32.mrb[0].mxu0
        %v913 = vadd.f32 %v697, %v912
        %v914 = vpop.f32.mrb[0].mxu0
        %915 = vmatprep.mubr.bf16.mxu0 0
        %916 = vmatmul.mubr.bf16.gmra.mrb[0].mxu0 %v811
        %v917 = vpop.f32.mrb[0].mxu0
        %v918 = vadd.f32 %v702, %v917
        %v919 = vpop.f32.mrb[0].mxu0
        %v920 = vpop.f32.mrb[0].mxu0
        %v921 = vadd.f32 %v705, %v920
        %v922 = vpop.f32.mrb[0].mxu0
        %923 = vmatprep.mubr.bf16.mxu0 0
        %924 = vmatmul.mubr.bf16.gmra.mrb[0].mxu0 %v814
        %v925 = vpop.f32.mrb[0].mxu0
        %v926 = vadd.f32 %v710, %v925
        %v927 = vpop.f32.mrb[0].mxu0
        %v928 = vpop.f32.mrb[0].mxu0
        %v929 = vadd.f32 %v713, %v928
        %v930 = vpop.f32.mrb[0].mxu0
        %931 = vmatprep.mubr.bf16.mxu0 0
        %932 = vmatmul.mubr.bf16.gmra.mrb[0].mxu0 %v817
        %v933 = vpop.f32.mrb[0].mxu0
        %v934 = vadd.f32 %v718, %v933
        %v935 = vpop.f32.mrb[0].mxu0
        %v936 = vpop.f32.mrb[0].mxu0
        %v937 = vadd.f32 %v721, %v936
        %v938 = vpop.f32.mrb[0].mxu0
        %939 = vmatprep.mubr.bf16.mxu0 0
        %940 = vmatmul.mubr.bf16.gmra.mrb[0].mxu0 %v820
        %v941 = vpop.f32.mrb[0].mxu0
        %v942 = vadd.f32 %v726, %v941
        %v943 = vpop.f32.mrb[0].mxu0
        %v944 = vpop.f32.mrb[0].mxu0
        %v945 = vadd.f32 %v729, %v944
        %v946 = vpop.f32.mrb[0].mxu0
        %947 = vmatprep.mubr.bf16.mxu0 0
        %948 = vmatmul.mubr.bf16.gmra.mrb[0].mxu0 %v823
        %v949 = vpop.f32.mrb[0].mxu0
        %v950 = vadd.f32 %v734, %v949
        %v951 = vpop.f32.mrb[0].mxu0
        %v952 = vpop.f32.mrb[0].mxu0
        %v953 = vadd.f32 %v737, %v952
        %v954 = vpop.f32.mrb[0].mxu0
        %955 = vmatprep.mubr.bf16.mxu0 0
        %956 = vmatmul.mubr.bf16.gmra.mrb[0].mxu0 %v826
        %v957 = vpop.f32.mrb[0].mxu0
        %v958 = vadd.f32 %v742, %v957
        %v959 = vpop.f32.mrb[0].mxu0
        %v960 = vpop.f32.mrb[0].mxu0
        %v961 = vadd.f32 %v745, %v960
        %v962 = vpop.f32.mrb[0].mxu0
        %963 = vmatprep.mubr.bf16.mxu0 0
        %964 = vmatmul.mubr.bf16.gmra.mrb[0].mxu0 %v829
        %v965 = vpop.f32.mrb[0].mxu0
        %v966 = vadd.f32 %v750, %v965
        %v967 = vpop.f32.mrb[0].mxu0
        %v968 = vpop.f32.mrb[0].mxu0
        %v969 = vadd.f32 %v753, %v968
        %v970 = vpop.f32.mrb[0].mxu0
        %971 = vmatprep.mubr.bf16.mxu0 0
        %972 = vmatmul.mubr.bf16.gmra.mrb[0].mxu0 %v832
        %v973 = vpop.f32.mrb[0].mxu0
        %v974 = vadd.f32 %v758, %v973
        %v975 = vpop.f32.mrb[0].mxu0
        %v976 = vpop.f32.mrb[0].mxu0
        %v977 = vadd.f32 %v761, %v976
        %v978 = vpop.f32.mrb[0].mxu0
        %979 = vmatprep.mubr.bf16.mxu0 0
        %980 = vmatmul.mubr.bf16.gmra.mrb[0].mxu0 %v835
        %v981 = vpop.f32.mrb[0].mxu0
        %v982 = vadd.f32 %v766, %v981
        %v983 = vpop.f32.mrb[0].mxu0
        %v984 = vpop.f32.mrb[0].mxu0
        %v985 = vadd.f32 %v769, %v984
        %v986 = vpop.f32.mrb[0].mxu0
        %987 = vmatprep.mubr.bf16.mxu0 0
        %988 = vmatmul.mubr.bf16.gmra.mrb[0].mxu0 %v838
        %v989 = vpop.f32.mrb[0].mxu0
        %v990 = vadd.f32 %v774, %v989
        %v991 = vpop.f32.mrb[0].mxu0
        %v992 = vpop.f32.mrb[0].mxu0
        %v993 = vadd.f32 %v777, %v992
        %v994 = vpop.f32.mrb[0].mxu0
        %995 = vmatprep.mubr.bf16.mxu0 0
        %996 = vmatmul.mubr.bf16.gmra.mrb[0].mxu0 %v841
        %v997 = vpop.f32.mrb[0].mxu0
        %v998 = vadd.f32 %v782, %v997
        %v999 = vpop.f32.mrb[0].mxu0
        %v1000 = vpop.f32.mrb[0].mxu0
        %v1001 = vadd.f32 %v785, %v1000
        %v1002 = vpop.f32.mrb[0].mxu0
        %1003 = vdwg.mxu0
        %v1004 = vpack.c.bf16 %v508, %v507
        %v1005 = vpack.c.bf16 %v510, %v509
        %v1006 = vpack.c.bf16 %v512, %v511
        %v1007 = vpack.c.bf16 %v514, %v513
        %v1008 = vpack.c.bf16 %v516, %v515
        %v1009 = vpack.c.bf16 %v518, %v517
        %v1010 = vpack.c.bf16 %v520, %v519
        %v1011 = vpack.c.bf16 %v522, %v521
        %v1012 = vpack.c.bf16 %v524, %v523
        %v1013 = vpack.c.bf16 %v526, %v525
        %v1014 = vpack.c.bf16 %v528, %v527
        %v1015 = vpack.c.bf16 %v530, %v529
        %v1016 = vpack.c.bf16 %v532, %v531
        %v1017 = vpack.c.bf16 %v534, %v533
        %v1018 = vpack.c.bf16 %v536, %v535
        %v1019 = vpack.c.bf16 %v538, %v537
        %v1020 = vld [vmem:[%s5] sm:$0xf]
        %v1021 = vld [vmem:[%s5 + $0x4] sm:$0xf]
        %v1024 = vunpack.c.l.b16 %v1020
        %v1025 = vunpack.c.l.b16 %v1021
        %v1026 = vpack.c.b16 %v1025, %v1024
        %v1029 = vsel %vm794, %v1004, 0
        %v1032 = vsel %vm794, %v1005, 0
        %v1035 = vsel %vm794, %v1006, 0
        %v1038 = vsel %vm794, %v1007, 0
        %v1041 = vsel %vm794, %v1008, 0
        %v1044 = vsel %vm794, %v1009, 0
        %v1047 = vsel %vm794, %v1010, 0
        %v1050 = vsel %vm794, %v1011, 0
        %v1053 = vsel %vm794, %v1012, 0
        %v1056 = vsel %vm794, %v1013, 0
        %v1059 = vsel %vm794, %v1014, 0
        %v1062 = vsel %vm794, %v1015, 0
        %v1065 = vsel %vm794, %v1016, 0
        %v1068 = vsel %vm794, %v1017, 0
        %v1071 = vsel %vm794, %v1018, 0
        %v1074 = vsel %vm794, %v1019, 0
        %1076 = vmatprep.subr.bf16.mxu0 0
        %1077 = vmatpush1.bf16.msra.mxu0 %v1026
        %1078 = vmatprep.subr.bf16.mxu0 0
        %1079 = vmatpush1.bf16.msra.mxu0 0
        %1080 = vmatprep.subr.bf16.mxu0 0
        %1081 = vmatpush1.bf16.msra.mxu0 0
        %1082 = vmatprep.subr.bf16.mxu0 0
        %1083 = vmatpush1.bf16.msra.mxu0 0
        %1084 = vmatprep.subr.bf16.mxu0 0
        %1085 = vmatpush1.bf16.msra.mxu0 0
        %1086 = vmatprep.subr.bf16.mxu0 0
        %1087 = vmatpush1.bf16.msra.mxu0 0
        %1088 = vmatprep.subr.bf16.mxu0 0
        %1089 = vmatpush1.bf16.msra.mxu0 0
        %1090 = vmatprep.subr.bf16.mxu0 0
        %1091 = vmatpush1.bf16.msra.mxu0 0
        %1092 = vmatprep.subr.bf16.mxu0 0
        %1093 = vmatpush1.bf16.msra.mxu0 0
        %1094 = vmatprep.subr.bf16.mxu0 0
        %1095 = vmatpush1.bf16.msra.mxu0 0
        %1096 = vmatprep.subr.bf16.mxu0 0
        %1097 = vmatpush1.bf16.msra.mxu0 0
        %1098 = vmatprep.subr.bf16.mxu0 0
        %1099 = vmatpush1.bf16.msra.mxu0 0
        %1100 = vmatprep.subr.bf16.mxu0 0
        %1101 = vmatpush1.bf16.msra.mxu0 0
        %1102 = vmatprep.subr.bf16.mxu0 0
        %1103 = vmatpush1.bf16.msra.mxu0 0
        %1104 = vmatprep.subr.bf16.mxu0 0
        %1105 = vmatpush1.bf16.msra.mxu0 0
        %1106 = vmatprep.subr.bf16.mxu0 0
        %1107 = vmatpush1.bf16.msra.mxu0 0
        %1108 = vmatprep.mubr.bf16.mxu0 0
        %1109 = vmatmul.mubr.bf16.gmra.mrb[0].mxu0 %v1029
        %v1110 = vpop.f32.mrb[0].mxu0
        %v1111 = vadd.f32 0.0, %v1110
        %v1112 = vpop.f32.mrb[0].mxu0
        %v1113 = vpop.f32.mrb[0].mxu0
        %v1114 = vadd.f32 0.0, %v1113
        %v1115 = vpop.f32.mrb[0].mxu0
        %1116 = vmatprep.mubr.bf16.mxu0 0
        %1117 = vmatmul.mubr.bf16.gmra.mrb[0].mxu0 %v1032
        %v1118 = vpop.f32.mrb[0].mxu0
        %v1119 = vadd.f32 0.0, %v1118
        %v1120 = vpop.f32.mrb[0].mxu0
        %v1121 = vpop.f32.mrb[0].mxu0
        %v1122 = vadd.f32 0.0, %v1121
        %v1123 = vpop.f32.mrb[0].mxu0
        %1124 = vmatprep.mubr.bf16.mxu0 0
        %1125 = vmatmul.mubr.bf16.gmra.mrb[0].mxu0 %v1035
        %v1126 = vpop.f32.mrb[0].mxu0
        %v1127 = vadd.f32 0.0, %v1126
        %v1128 = vpop.f32.mrb[0].mxu0
        %v1129 = vpop.f32.mrb[0].mxu0
        %v1130 = vadd.f32 0.0, %v1129
        %v1131 = vpop.f32.mrb[0].mxu0
        %1132 = vmatprep.mubr.bf16.mxu0 0
        %1133 = vmatmul.mubr.bf16.gmra.mrb[0].mxu0 %v1038
        %v1134 = vpop.f32.mrb[0].mxu0
        %v1135 = vadd.f32 0.0, %v1134
        %v1136 = vpop.f32.mrb[0].mxu0
        %v1137 = vpop.f32.mrb[0].mxu0
        %v1138 = vadd.f32 0.0, %v1137
        %v1139 = vpop.f32.mrb[0].mxu0
        %1140 = vmatprep.mubr.bf16.mxu0 0
        %1141 = vmatmul.mubr.bf16.gmra.mrb[0].mxu0 %v1041
        %v1142 = vpop.f32.mrb[0].mxu0
        %v1143 = vadd.f32 0.0, %v1142
        %v1144 = vpop.f32.mrb[0].mxu0
        %v1145 = vpop.f32.mrb[0].mxu0
        %v1146 = vadd.f32 0.0, %v1145
        %v1147 = vpop.f32.mrb[0].mxu0
        %1148 = vmatprep.mubr.bf16.mxu0 0
        %1149 = vmatmul.mubr.bf16.gmra.mrb[0].mxu0 %v1044
        %v1150 = vpop.f32.mrb[0].mxu0
        %v1151 = vadd.f32 0.0, %v1150
        %v1152 = vpop.f32.mrb[0].mxu0
        %v1153 = vpop.f32.mrb[0].mxu0
        %v1154 = vadd.f32 0.0, %v1153
        %v1155 = vpop.f32.mrb[0].mxu0
        %1156 = vmatprep.mubr.bf16.mxu0 0
        %1157 = vmatmul.mubr.bf16.gmra.mrb[0].mxu0 %v1047
        %v1158 = vpop.f32.mrb[0].mxu0
        %v1159 = vadd.f32 0.0, %v1158
        %v1160 = vpop.f32.mrb[0].mxu0
        %v1161 = vpop.f32.mrb[0].mxu0
        %v1162 = vadd.f32 0.0, %v1161
        %v1163 = vpop.f32.mrb[0].mxu0
        %1164 = vmatprep.mubr.bf16.mxu0 0
        %1165 = vmatmul.mubr.bf16.gmra.mrb[0].mxu0 %v1050
        %v1166 = vpop.f32.mrb[0].mxu0
        %v1167 = vadd.f32 0.0, %v1166
        %v1168 = vpop.f32.mrb[0].mxu0
        %v1169 = vpop.f32.mrb[0].mxu0
        %v1170 = vadd.f32 0.0, %v1169
        %v1171 = vpop.f32.mrb[0].mxu0
        %1172 = vmatprep.mubr.bf16.mxu0 0
        %1173 = vmatmul.mubr.bf16.gmra.mrb[0].mxu0 %v1053
        %v1174 = vpop.f32.mrb[0].mxu0
        %v1175 = vadd.f32 0.0, %v1174
        %v1176 = vpop.f32.mrb[0].mxu0
        %v1177 = vpop.f32.mrb[0].mxu0
        %v1178 = vadd.f32 0.0, %v1177
        %v1179 = vpop.f32.mrb[0].mxu0
        %1180 = vmatprep.mubr.bf16.mxu0 0
        %1181 = vmatmul.mubr.bf16.gmra.mrb[0].mxu0 %v1056
        %v1182 = vpop.f32.mrb[0].mxu0
        %v1183 = vadd.f32 0.0, %v1182
        %v1184 = vpop.f32.mrb[0].mxu0
        %v1185 = vpop.f32.mrb[0].mxu0
        %v1186 = vadd.f32 0.0, %v1185
        %v1187 = vpop.f32.mrb[0].mxu0
        %1188 = vmatprep.mubr.bf16.mxu0 0
        %1189 = vmatmul.mubr.bf16.gmra.mrb[0].mxu0 %v1059
        %v1190 = vpop.f32.mrb[0].mxu0
        %v1191 = vadd.f32 0.0, %v1190
        %v1192 = vpop.f32.mrb[0].mxu0
        %v1193 = vpop.f32.mrb[0].mxu0
        %v1194 = vadd.f32 0.0, %v1193
        %v1195 = vpop.f32.mrb[0].mxu0
        %1196 = vmatprep.mubr.bf16.mxu0 0
        %1197 = vmatmul.mubr.bf16.gmra.mrb[0].mxu0 %v1062
        %v1198 = vpop.f32.mrb[0].mxu0
        %v1199 = vadd.f32 0.0, %v1198
        %v1200 = vpop.f32.mrb[0].mxu0
        %v1201 = vpop.f32.mrb[0].mxu0
        %v1202 = vadd.f32 0.0, %v1201
        %v1203 = vpop.f32.mrb[0].mxu0
        %1204 = vmatprep.mubr.bf16.mxu0 0
        %1205 = vmatmul.mubr.bf16.gmra.mrb[0].mxu0 %v1065
        %v1206 = vpop.f32.mrb[0].mxu0
        %v1207 = vadd.f32 0.0, %v1206
        %v1208 = vpop.f32.mrb[0].mxu0
        %v1209 = vpop.f32.mrb[0].mxu0
        %v1210 = vadd.f32 0.0, %v1209
        %v1211 = vpop.f32.mrb[0].mxu0
        %1212 = vmatprep.mubr.bf16.mxu0 0
        %1213 = vmatmul.mubr.bf16.gmra.mrb[0].mxu0 %v1068
        %v1214 = vpop.f32.mrb[0].mxu0
        %v1215 = vadd.f32 0.0, %v1214
        %v1216 = vpop.f32.mrb[0].mxu0
        %v1217 = vpop.f32.mrb[0].mxu0
        %v1218 = vadd.f32 0.0, %v1217
        %v1219 = vpop.f32.mrb[0].mxu0
        %1220 = vmatprep.mubr.bf16.mxu0 0
        %1221 = vmatmul.mubr.bf16.gmra.mrb[0].mxu0 %v1071
        %v1222 = vpop.f32.mrb[0].mxu0
        %v1223 = vadd.f32 0.0, %v1222
        %v1224 = vpop.f32.mrb[0].mxu0
        %v1225 = vpop.f32.mrb[0].mxu0
        %v1226 = vadd.f32 0.0, %v1225
        %v1227 = vpop.f32.mrb[0].mxu0
        %1228 = vmatprep.mubr.bf16.mxu0 0
        %1229 = vmatmul.mubr.bf16.gmra.mrb[0].mxu0 %v1074
        %v1230 = vpop.f32.mrb[0].mxu0
        %v1231 = vadd.f32 0.0, %v1230
        %v1232 = vpop.f32.mrb[0].mxu0
        %v1233 = vpop.f32.mrb[0].mxu0
        %v1234 = vadd.f32 0.0, %v1233
        %v1235 = vpop.f32.mrb[0].mxu0
        %1236 = vdwg.mxu0
        %v1237 = vadd.f32 %v878, %v1111
        %v1238 = vadd.f32 %v881, %v1114
        %v1239 = vadd.f32 %v886, %v1119
        %v1240 = vadd.f32 %v889, %v1122
        %v1241 = vadd.f32 %v894, %v1127
        %v1242 = vadd.f32 %v897, %v1130
        %v1243 = vadd.f32 %v902, %v1135
        %v1244 = vadd.f32 %v905, %v1138
        %v1245 = vadd.f32 %v910, %v1143
        %v1246 = vadd.f32 %v913, %v1146
        %v1247 = vadd.f32 %v918, %v1151
        %v1248 = vadd.f32 %v921, %v1154
        %v1249 = vadd.f32 %v926, %v1159
        %v1250 = vadd.f32 %v929, %v1162
        %v1251 = vadd.f32 %v934, %v1167
        %v1252 = vadd.f32 %v937, %v1170
        %v1253 = vadd.f32 %v942, %v1175
        %v1254 = vadd.f32 %v945, %v1178
        %v1255 = vadd.f32 %v950, %v1183
        %v1256 = vadd.f32 %v953, %v1186
        %v1257 = vadd.f32 %v958, %v1191
        %v1258 = vadd.f32 %v961, %v1194
        %v1259 = vadd.f32 %v966, %v1199
        %v1260 = vadd.f32 %v969, %v1202
        %v1261 = vadd.f32 %v974, %v1207
        %v1262 = vadd.f32 %v977, %v1210
        %v1263 = vadd.f32 %v982, %v1215
        %v1264 = vadd.f32 %v985, %v1218
        %v1265 = vadd.f32 %v990, %v1223
        %v1266 = vadd.f32 %v993, %v1226
        %v1267 = vadd.f32 %v998, %v1231
        %v1268 = vadd.f32 %v1001, %v1234
        %v1269 = vld [vmem:[%s6] sm:$0x1]
        %v1271 = vlaneseq
        %v1272 = vshrl.u32 %v1271, 7
        %v1273 = vsub.s32 0, %v1272
        %v1274 = vrot.slane %v1269, %v1273
        %v1276 = vadd.f32 %v1237, %v1274
        %v1277 = vadd.f32 %v1238, %v1274
        %v1278 = vadd.f32 %v1239, %v1274
        %v1279 = vadd.f32 %v1240, %v1274
        %v1280 = vadd.f32 %v1241, %v1274
        %v1281 = vadd.f32 %v1242, %v1274
        %v1282 = vadd.f32 %v1243, %v1274
        %v1283 = vadd.f32 %v1244, %v1274
        %v1284 = vadd.f32 %v1245, %v1274
        %v1285 = vadd.f32 %v1246, %v1274
        %v1286 = vadd.f32 %v1247, %v1274
        %v1287 = vadd.f32 %v1248, %v1274
        %v1288 = vadd.f32 %v1249, %v1274
        %v1289 = vadd.f32 %v1250, %v1274
        %v1290 = vadd.f32 %v1251, %v1274
        %v1291 = vadd.f32 %v1252, %v1274
        %v1292 = vadd.f32 %v1253, %v1274
        %v1293 = vadd.f32 %v1254, %v1274
        %v1294 = vadd.f32 %v1255, %v1274
        %v1295 = vadd.f32 %v1256, %v1274
        %v1296 = vadd.f32 %v1257, %v1274
        %v1297 = vadd.f32 %v1258, %v1274
        %v1298 = vadd.f32 %v1259, %v1274
        %v1299 = vadd.f32 %v1260, %v1274
        %v1300 = vadd.f32 %v1261, %v1274
        %v1301 = vadd.f32 %v1262, %v1274
        %v1302 = vadd.f32 %v1263, %v1274
        %v1303 = vadd.f32 %v1264, %v1274
        %v1304 = vadd.f32 %v1265, %v1274
        %v1305 = vadd.f32 %v1266, %v1274
        %v1306 = vadd.f32 %v1267, %v1274
        %v1307 = vadd.f32 %v1268, %v1274
        %v1308 = vmax.f32 %v1276, 0.0
        %v1309 = vmax.f32 %v1277, 0.0
        %v1310 = vmax.f32 %v1278, 0.0
        %v1311 = vmax.f32 %v1279, 0.0
        %v1312 = vmax.f32 %v1280, 0.0
        %v1313 = vmax.f32 %v1281, 0.0
        %v1314 = vmax.f32 %v1282, 0.0
        %v1315 = vmax.f32 %v1283, 0.0
        %v1316 = vmax.f32 %v1284, 0.0
        %v1317 = vmax.f32 %v1285, 0.0
        %v1318 = vmax.f32 %v1286, 0.0
        %v1319 = vmax.f32 %v1287, 0.0
        %v1320 = vmax.f32 %v1288, 0.0
        %v1321 = vmax.f32 %v1289, 0.0
        %v1322 = vmax.f32 %v1290, 0.0
        %v1323 = vmax.f32 %v1291, 0.0
        %v1324 = vmax.f32 %v1292, 0.0
        %v1325 = vmax.f32 %v1293, 0.0
        %v1326 = vmax.f32 %v1294, 0.0
        %v1327 = vmax.f32 %v1295, 0.0
        %v1328 = vmax.f32 %v1296, 0.0
        %v1329 = vmax.f32 %v1297, 0.0
        %v1330 = vmax.f32 %v1298, 0.0
        %v1331 = vmax.f32 %v1299, 0.0
        %v1332 = vmax.f32 %v1300, 0.0
        %v1333 = vmax.f32 %v1301, 0.0
        %v1334 = vmax.f32 %v1302, 0.0
        %v1335 = vmax.f32 %v1303, 0.0
        %v1336 = vmax.f32 %v1304, 0.0
        %v1337 = vmax.f32 %v1305, 0.0
        %v1338 = vmax.f32 %v1306, 0.0
        %v1339 = vmax.f32 %v1307, 0.0
        %v1340 = vpack.c.bf16 %v1309, %v1308
        %v1341 = vpack.c.bf16 %v1311, %v1310
        %v1342 = vpack.c.bf16 %v1313, %v1312
        %v1343 = vpack.c.bf16 %v1315, %v1314
        %v1344 = vpack.c.bf16 %v1317, %v1316
        %v1345 = vpack.c.bf16 %v1319, %v1318
        %v1346 = vpack.c.bf16 %v1321, %v1320
        %v1347 = vpack.c.bf16 %v1323, %v1322
        %v1348 = vpack.c.bf16 %v1325, %v1324
        %v1349 = vpack.c.bf16 %v1327, %v1326
        %v1350 = vpack.c.bf16 %v1329, %v1328
        %v1351 = vpack.c.bf16 %v1331, %v1330
        %v1352 = vpack.c.bf16 %v1333, %v1332
        %v1353 = vpack.c.bf16 %v1335, %v1334
        %v1354 = vpack.c.bf16 %v1337, %v1336
        %v1355 = vpack.c.bf16 %v1339, %v1338
        %v1356 = vld [vmem:[%s7] sm:$0xf]
        %v1357 = vld [vmem:[%s7 + $0x4] sm:$0xf]
        %v1358 = vld [vmem:[%s7 + $0x8] sm:$0xf]
        %v1359 = vld [vmem:[%s7 + $0xc] sm:$0xf]
        %v1360 = vld [vmem:[%s7 + $0x10] sm:$0xf]
        %v1361 = vld [vmem:[%s7 + $0x14] sm:$0xf]
        %v1362 = vld [vmem:[%s7 + $0x18] sm:$0xf]
        %v1363 = vld [vmem:[%s7 + $0x1c] sm:$0xf]
        %v1364 = vld [vmem:[%s8] sm:$0x1]
        %v1366 = vlaneseq
        %v1367 = vshrl.u32 %v1366, 7
        %v1368 = vsub.s32 0, %v1367
        %v1369 = vrot.slane %v1364, %v1368
        %v1379 = vunpack.c.l.b16 %v1356
        %v1380 = vunpack.c.l.b16 %v1357
        %v1381 = vunpack.c.l.b16 %v1358
        %v1382 = vunpack.c.l.b16 %v1359
        %v1383 = vunpack.c.l.b16 %v1360
        %v1384 = vunpack.c.l.b16 %v1361
        %v1385 = vunpack.c.l.b16 %v1362
        %v1386 = vunpack.c.l.b16 %v1363
        %v1387 = vpack.c.b16 %v1380, %v1379
        %v1388 = vpack.c.b16 %v1382, %v1381
        %v1389 = vpack.c.b16 %v1384, %v1383
        %v1390 = vpack.c.b16 %v1386, %v1385
        %vm1395 = vcmask 523264
        %v1397 = vsel %vm1395, %v1340, 0
        %v1400 = vsel %vm1395, %v1341, 0
        %v1403 = vsel %vm1395, %v1342, 0
        %v1406 = vsel %vm1395, %v1343, 0
        %v1409 = vsel %vm1395, %v1344, 0
        %v1412 = vsel %vm1395, %v1345, 0
        %v1415 = vsel %vm1395, %v1346, 0
        %v1418 = vsel %vm1395, %v1347, 0
        %v1421 = vsel %vm1395, %v1348, 0
        %v1424 = vsel %vm1395, %v1349, 0
        %v1427 = vsel %vm1395, %v1350, 0
        %v1430 = vsel %vm1395, %v1351, 0
        %v1433 = vsel %vm1395, %v1352, 0
        %v1436 = vsel %vm1395, %v1353, 0
        %v1439 = vsel %vm1395, %v1354, 0
        %v1442 = vsel %vm1395, %v1355, 0
        %1444 = vmatprep.subr.bf16.mxu0 0
        %1445 = vmatpush1.bf16.msra.mxu0 %v1387
        %1446 = vmatprep.subr.bf16.mxu0 0
        %1447 = vmatpush1.bf16.msra.mxu0 %v1388
        %1448 = vmatprep.subr.bf16.mxu0 0
        %1449 = vmatpush1.bf16.msra.mxu0 %v1389
        %1450 = vmatprep.subr.bf16.mxu0 0
        %1451 = vmatpush1.bf16.msra.mxu0 %v1390
        %1452 = vmatprep.subr.bf16.mxu0 0
        %1453 = vmatpush1.bf16.msra.mxu0 0
        %1454 = vmatprep.subr.bf16.mxu0 0
        %1455 = vmatpush1.bf16.msra.mxu0 0
        %1456 = vmatprep.subr.bf16.mxu0 0
        %1457 = vmatpush1.bf16.msra.mxu0 0
        %1458 = vmatprep.subr.bf16.mxu0 0
        %1459 = vmatpush1.bf16.msra.mxu0 0
        %1460 = vmatprep.subr.bf16.mxu0 0
        %1461 = vmatpush1.bf16.msra.mxu0 0
        %1462 = vmatprep.subr.bf16.mxu0 0
        %1463 = vmatpush1.bf16.msra.mxu0 0
        %1464 = vmatprep.subr.bf16.mxu0 0
        %1465 = vmatpush1.bf16.msra.mxu0 0
        %1466 = vmatprep.subr.bf16.mxu0 0
        %1467 = vmatpush1.bf16.msra.mxu0 0
        %1468 = vmatprep.subr.bf16.mxu0 0
        %1469 = vmatpush1.bf16.msra.mxu0 0
        %1470 = vmatprep.subr.bf16.mxu0 0
        %1471 = vmatpush1.bf16.msra.mxu0 0
        %1472 = vmatprep.subr.bf16.mxu0 0
        %1473 = vmatpush1.bf16.msra.mxu0 0
        %1474 = vmatprep.subr.bf16.mxu0 0
        %1475 = vmatpush1.bf16.msra.mxu0 0
        %1476 = vmatprep.mubr.bf16.mxu0 0
        %1477 = vmatmul.mubr.bf16.gmra.mrb[0].mxu0 %v1397
        %v1478 = vpop.f32.mrb[0].mxu0
        %v1479 = vadd.f32 %v1369, %v1478
        %v1480 = vpop.f32.mrb[0].mxu0
        %v1481 = vpop.f32.mrb[0].mxu0
        %v1482 = vadd.f32 %v1369, %v1481
        %v1483 = vpop.f32.mrb[0].mxu0
        %1484 = vmatprep.mubr.bf16.mxu0 0
        %1485 = vmatmul.mubr.bf16.gmra.mrb[0].mxu0 %v1400
        %v1486 = vpop.f32.mrb[0].mxu0
        %v1487 = vadd.f32 %v1369, %v1486
        %v1488 = vpop.f32.mrb[0].mxu0
        %v1489 = vpop.f32.mrb[0].mxu0
        %v1490 = vadd.f32 %v1369, %v1489
        %v1491 = vpop.f32.mrb[0].mxu0
        %1492 = vmatprep.mubr.bf16.mxu0 0
        %1493 = vmatmul.mubr.bf16.gmra.mrb[0].mxu0 %v1403
        %v1494 = vpop.f32.mrb[0].mxu0
        %v1495 = vadd.f32 %v1369, %v1494
        %v1496 = vpop.f32.mrb[0].mxu0
        %v1497 = vpop.f32.mrb[0].mxu0
        %v1498 = vadd.f32 %v1369, %v1497
        %v1499 = vpop.f32.mrb[0].mxu0
        %1500 = vmatprep.mubr.bf16.mxu0 0
        %1501 = vmatmul.mubr.bf16.gmra.mrb[0].mxu0 %v1406
        %v1502 = vpop.f32.mrb[0].mxu0
        %v1503 = vadd.f32 %v1369, %v1502
        %v1504 = vpop.f32.mrb[0].mxu0
        %v1505 = vpop.f32.mrb[0].mxu0
        %v1506 = vadd.f32 %v1369, %v1505
        %v1507 = vpop.f32.mrb[0].mxu0
        %1508 = vmatprep.mubr.bf16.mxu0 0
        %1509 = vmatmul.mubr.bf16.gmra.mrb[0].mxu0 %v1409
        %v1510 = vpop.f32.mrb[0].mxu0
        %v1511 = vadd.f32 %v1369, %v1510
        %v1512 = vpop.f32.mrb[0].mxu0
        %v1513 = vpop.f32.mrb[0].mxu0
        %v1514 = vadd.f32 %v1369, %v1513
        %v1515 = vpop.f32.mrb[0].mxu0
        %1516 = vmatprep.mubr.bf16.mxu0 0
        %1517 = vmatmul.mubr.bf16.gmra.mrb[0].mxu0 %v1412
        %v1518 = vpop.f32.mrb[0].mxu0
        %v1519 = vadd.f32 %v1369, %v1518
        %v1520 = vpop.f32.mrb[0].mxu0
        %v1521 = vpop.f32.mrb[0].mxu0
        %v1522 = vadd.f32 %v1369, %v1521
        %v1523 = vpop.f32.mrb[0].mxu0
        %1524 = vmatprep.mubr.bf16.mxu0 0
        %1525 = vmatmul.mubr.bf16.gmra.mrb[0].mxu0 %v1415
        %v1526 = vpop.f32.mrb[0].mxu0
        %v1527 = vadd.f32 %v1369, %v1526
        %v1528 = vpop.f32.mrb[0].mxu0
        %v1529 = vpop.f32.mrb[0].mxu0
        %v1530 = vadd.f32 %v1369, %v1529
        %v1531 = vpop.f32.mrb[0].mxu0
        %1532 = vmatprep.mubr.bf16.mxu0 0
        %1533 = vmatmul.mubr.bf16.gmra.mrb[0].mxu0 %v1418
        %v1534 = vpop.f32.mrb[0].mxu0
        %v1535 = vadd.f32 %v1369, %v1534
        %v1536 = vpop.f32.mrb[0].mxu0
        %v1537 = vpop.f32.mrb[0].mxu0
        %v1538 = vadd.f32 %v1369, %v1537
        %v1539 = vpop.f32.mrb[0].mxu0
        %1540 = vmatprep.mubr.bf16.mxu0 0
        %1541 = vmatmul.mubr.bf16.gmra.mrb[0].mxu0 %v1421
        %v1542 = vpop.f32.mrb[0].mxu0
        %v1543 = vadd.f32 %v1369, %v1542
        %v1544 = vpop.f32.mrb[0].mxu0
        %v1545 = vpop.f32.mrb[0].mxu0
        %v1546 = vadd.f32 %v1369, %v1545
        %v1547 = vpop.f32.mrb[0].mxu0
        %1548 = vmatprep.mubr.bf16.mxu0 0
        %1549 = vmatmul.mubr.bf16.gmra.mrb[0].mxu0 %v1424
        %v1550 = vpop.f32.mrb[0].mxu0
        %v1551 = vadd.f32 %v1369, %v1550
        %v1552 = vpop.f32.mrb[0].mxu0
        %v1553 = vpop.f32.mrb[0].mxu0
        %v1554 = vadd.f32 %v1369, %v1553
        %v1555 = vpop.f32.mrb[0].mxu0
        %1556 = vmatprep.mubr.bf16.mxu0 0
        %1557 = vmatmul.mubr.bf16.gmra.mrb[0].mxu0 %v1427
        %v1558 = vpop.f32.mrb[0].mxu0
        %v1559 = vadd.f32 %v1369, %v1558
        %v1560 = vpop.f32.mrb[0].mxu0
        %v1561 = vpop.f32.mrb[0].mxu0
        %v1562 = vadd.f32 %v1369, %v1561
        %v1563 = vpop.f32.mrb[0].mxu0
        %1564 = vmatprep.mubr.bf16.mxu0 0
        %1565 = vmatmul.mubr.bf16.gmra.mrb[0].mxu0 %v1430
        %v1566 = vpop.f32.mrb[0].mxu0
        %v1567 = vadd.f32 %v1369, %v1566
        %v1568 = vpop.f32.mrb[0].mxu0
        %v1569 = vpop.f32.mrb[0].mxu0
        %v1570 = vadd.f32 %v1369, %v1569
        %v1571 = vpop.f32.mrb[0].mxu0
        %1572 = vmatprep.mubr.bf16.mxu0 0
        %1573 = vmatmul.mubr.bf16.gmra.mrb[0].mxu0 %v1433
        %v1574 = vpop.f32.mrb[0].mxu0
        %v1575 = vadd.f32 %v1369, %v1574
        %v1576 = vpop.f32.mrb[0].mxu0
        %v1577 = vpop.f32.mrb[0].mxu0
        %v1578 = vadd.f32 %v1369, %v1577
        %v1579 = vpop.f32.mrb[0].mxu0
        %1580 = vmatprep.mubr.bf16.mxu0 0
        %1581 = vmatmul.mubr.bf16.gmra.mrb[0].mxu0 %v1436
        %v1582 = vpop.f32.mrb[0].mxu0
        %v1583 = vadd.f32 %v1369, %v1582
        %v1584 = vpop.f32.mrb[0].mxu0
        %v1585 = vpop.f32.mrb[0].mxu0
        %v1586 = vadd.f32 %v1369, %v1585
        %v1587 = vpop.f32.mrb[0].mxu0
        %1588 = vmatprep.mubr.bf16.mxu0 0
        %1589 = vmatmul.mubr.bf16.gmra.mrb[0].mxu0 %v1439
        %v1590 = vpop.f32.mrb[0].mxu0
        %v1591 = vadd.f32 %v1369, %v1590
        %v1592 = vpop.f32.mrb[0].mxu0
        %v1593 = vpop.f32.mrb[0].mxu0
        %v1594 = vadd.f32 %v1369, %v1593
        %v1595 = vpop.f32.mrb[0].mxu0
        %1596 = vmatprep.mubr.bf16.mxu0 0
        %1597 = vmatmul.mubr.bf16.gmra.mrb[0].mxu0 %v1442
        %v1598 = vpop.f32.mrb[0].mxu0
        %v1599 = vadd.f32 %v1369, %v1598
        %v1600 = vpop.f32.mrb[0].mxu0
        %v1601 = vpop.f32.mrb[0].mxu0
        %v1602 = vadd.f32 %v1369, %v1601
        %v1603 = vpop.f32.mrb[0].mxu0
        %1604 = vdwg.mxu0
        %v1605 = vlaneseq
        %v1606 = vand.u32 %v1605, 127
        %vm1607 = vcmp.lt.s32.totalorder %v1606, 16
        %v1608 = vtanh.pop %v1479
        %v1609 = vtanh.pop %v1482
        %v1610 = vtanh.pop %v1487
        %v1611 = vtanh.pop %v1490
        %v1612 = vtanh.pop %v1495
        %v1613 = vtanh.pop %v1498
        %v1614 = vtanh.pop %v1503
        %v1615 = vtanh.pop %v1506
        %v1616 = vtanh.pop %v1511
        %v1617 = vtanh.pop %v1514
        %v1618 = vtanh.pop %v1519
        %v1619 = vtanh.pop %v1522
        %v1620 = vtanh.pop %v1527
        %v1621 = vtanh.pop %v1530
        %v1622 = vtanh.pop %v1535
        %v1623 = vtanh.pop %v1538
        %v1624 = vtanh.pop %v1543
        %v1625 = vtanh.pop %v1546
        %v1626 = vtanh.pop %v1551
        %v1627 = vtanh.pop %v1554
        %v1628 = vtanh.pop %v1559
        %v1629 = vtanh.pop %v1562
        %v1630 = vtanh.pop %v1567
        %v1631 = vtanh.pop %v1570
        %v1632 = vtanh.pop %v1575
        %v1633 = vtanh.pop %v1578
        %v1634 = vtanh.pop %v1583
        %v1635 = vtanh.pop %v1586
        %v1636 = vtanh.pop %v1591
        %v1637 = vtanh.pop %v1594
        %v1638 = vtanh.pop %v1599
        %v1639 = vtanh.pop %v1602
        %v1640 = vsel %vm1607, %v1479, %v1608
        %v1641 = vsel %vm1607, %v1482, %v1609
        %v1642 = vsel %vm1607, %v1487, %v1610
        %v1643 = vsel %vm1607, %v1490, %v1611
        %v1644 = vsel %vm1607, %v1495, %v1612
        %v1645 = vsel %vm1607, %v1498, %v1613
        %v1646 = vsel %vm1607, %v1503, %v1614
        %v1647 = vsel %vm1607, %v1506, %v1615
        %v1648 = vsel %vm1607, %v1511, %v1616
        %v1649 = vsel %vm1607, %v1514, %v1617
        %v1650 = vsel %vm1607, %v1519, %v1618
        %v1651 = vsel %vm1607, %v1522, %v1619
        %v1652 = vsel %vm1607, %v1527, %v1620
        %v1653 = vsel %vm1607, %v1530, %v1621
        %v1654 = vsel %vm1607, %v1535, %v1622
        %v1655 = vsel %vm1607, %v1538, %v1623
        %v1656 = vsel %vm1607, %v1543, %v1624
        %v1657 = vsel %vm1607, %v1546, %v1625
        %v1658 = vsel %vm1607, %v1551, %v1626
        %v1659 = vsel %vm1607, %v1554, %v1627
        %v1660 = vsel %vm1607, %v1559, %v1628
        %v1661 = vsel %vm1607, %v1562, %v1629
        %v1662 = vsel %vm1607, %v1567, %v1630
        %v1663 = vsel %vm1607, %v1570, %v1631
        %v1664 = vsel %vm1607, %v1575, %v1632
        %v1665 = vsel %vm1607, %v1578, %v1633
        %v1666 = vsel %vm1607, %v1583, %v1634
        %v1667 = vsel %vm1607, %v1586, %v1635
        %v1668 = vsel %vm1607, %v1591, %v1636
        %v1669 = vsel %vm1607, %v1594, %v1637
        %v1670 = vsel %vm1607, %v1599, %v1638
        %v1671 = vsel %vm1607, %v1602, %v1639
        %1704 = vrot.lane.b32.xlu0 %v475, 16
        %v1705 = vpop.permute.xlu0 %1704
        %1706 = vrot.lane.b32.xlu0 %v476, 16
        %v1707 = vpop.permute.xlu0 %1706
        %1708 = vrot.lane.b32.xlu0 %v477, 16
        %v1709 = vpop.permute.xlu0 %1708
        %1710 = vrot.lane.b32.xlu0 %v478, 16
        %v1711 = vpop.permute.xlu0 %1710
        %1712 = vrot.lane.b32.xlu0 %v479, 16
        %v1713 = vpop.permute.xlu0 %1712
        %1714 = vrot.lane.b32.xlu0 %v480, 16
        %v1715 = vpop.permute.xlu0 %1714
        %1716 = vrot.lane.b32.xlu0 %v481, 16
        %v1717 = vpop.permute.xlu0 %1716
        %1718 = vrot.lane.b32.xlu0 %v482, 16
        %v1719 = vpop.permute.xlu0 %1718
        %1720 = vrot.lane.b32.xlu0 %v483, 16
        %v1721 = vpop.permute.xlu0 %1720
        %1722 = vrot.lane.b32.xlu0 %v484, 16
        %v1723 = vpop.permute.xlu0 %1722
        %1724 = vrot.lane.b32.xlu0 %v485, 16
        %v1725 = vpop.permute.xlu0 %1724
        %1726 = vrot.lane.b32.xlu0 %v486, 16
        %v1727 = vpop.permute.xlu0 %1726
        %1728 = vrot.lane.b32.xlu0 %v487, 16
        %v1729 = vpop.permute.xlu0 %1728
        %1730 = vrot.lane.b32.xlu0 %v488, 16
        %v1731 = vpop.permute.xlu0 %1730
        %1732 = vrot.lane.b32.xlu0 %v489, 16
        %v1733 = vpop.permute.xlu0 %1732
        %1734 = vrot.lane.b32.xlu0 %v490, 16
        %v1735 = vpop.permute.xlu0 %1734
        %1736 = vrot.lane.b32.xlu0 %v491, 16
        %v1737 = vpop.permute.xlu0 %1736
        %1738 = vrot.lane.b32.xlu0 %v492, 16
        %v1739 = vpop.permute.xlu0 %1738
        %1740 = vrot.lane.b32.xlu0 %v493, 16
        %v1741 = vpop.permute.xlu0 %1740
        %1742 = vrot.lane.b32.xlu0 %v494, 16
        %v1743 = vpop.permute.xlu0 %1742
        %1744 = vrot.lane.b32.xlu0 %v495, 16
        %v1745 = vpop.permute.xlu0 %1744
        %1746 = vrot.lane.b32.xlu0 %v496, 16
        %v1747 = vpop.permute.xlu0 %1746
        %1748 = vrot.lane.b32.xlu0 %v497, 16
        %v1749 = vpop.permute.xlu0 %1748
        %1750 = vrot.lane.b32.xlu0 %v498, 16
        %v1751 = vpop.permute.xlu0 %1750
        %1752 = vrot.lane.b32.xlu0 %v499, 16
        %v1753 = vpop.permute.xlu0 %1752
        %1754 = vrot.lane.b32.xlu0 %v500, 16
        %v1755 = vpop.permute.xlu0 %1754
        %1756 = vrot.lane.b32.xlu0 %v501, 16
        %v1757 = vpop.permute.xlu0 %1756
        %1758 = vrot.lane.b32.xlu0 %v502, 16
        %v1759 = vpop.permute.xlu0 %1758
        %1760 = vrot.lane.b32.xlu0 %v503, 16
        %v1761 = vpop.permute.xlu0 %1760
        %1762 = vrot.lane.b32.xlu0 %v504, 16
        %v1763 = vpop.permute.xlu0 %1762
        %1764 = vrot.lane.b32.xlu0 %v505, 16
        %v1765 = vpop.permute.xlu0 %1764
        %1766 = vrot.lane.b32.xlu0 %v506, 16
        %v1767 = vpop.permute.xlu0 %1766
        %v1800 = vsel %vm794, %v507, %v1705
        %v1801 = vsel %vm794, %v508, %v1707
        %v1802 = vsel %vm794, %v509, %v1709
        %v1803 = vsel %vm794, %v510, %v1711
        %v1804 = vsel %vm794, %v511, %v1713
        %v1805 = vsel %vm794, %v512, %v1715
        %v1806 = vsel %vm794, %v513, %v1717
        %v1807 = vsel %vm794, %v514, %v1719
        %v1808 = vsel %vm794, %v515, %v1721
        %v1809 = vsel %vm794, %v516, %v1723
        %v1810 = vsel %vm794, %v517, %v1725
        %v1811 = vsel %vm794, %v518, %v1727
        %v1812 = vsel %vm794, %v519, %v1729
        %v1813 = vsel %vm794, %v520, %v1731
        %v1814 = vsel %vm794, %v521, %v1733
        %v1815 = vsel %vm794, %v522, %v1735
        %v1816 = vsel %vm794, %v523, %v1737
        %v1817 = vsel %vm794, %v524, %v1739
        %v1818 = vsel %vm794, %v525, %v1741
        %v1819 = vsel %vm794, %v526, %v1743
        %v1820 = vsel %vm794, %v527, %v1745
        %v1821 = vsel %vm794, %v528, %v1747
        %v1822 = vsel %vm794, %v529, %v1749
        %v1823 = vsel %vm794, %v530, %v1751
        %v1824 = vsel %vm794, %v531, %v1753
        %v1825 = vsel %vm794, %v532, %v1755
        %v1826 = vsel %vm794, %v533, %v1757
        %v1827 = vsel %vm794, %v534, %v1759
        %v1828 = vsel %vm794, %v535, %v1761
        %v1829 = vsel %vm794, %v536, %v1763
        %v1830 = vsel %vm794, %v537, %v1765
        %v1831 = vsel %vm794, %v538, %v1767
        %v1832 = vsub.f32 %v1800, %v1640
        %v1833 = vsub.f32 %v1801, %v1641
        %v1834 = vsub.f32 %v1802, %v1642
        %v1835 = vsub.f32 %v1803, %v1643
        %v1836 = vsub.f32 %v1804, %v1644
        %v1837 = vsub.f32 %v1805, %v1645
        %v1838 = vsub.f32 %v1806, %v1646
        %v1839 = vsub.f32 %v1807, %v1647
        %v1840 = vsub.f32 %v1808, %v1648
        %v1841 = vsub.f32 %v1809, %v1649
        %v1842 = vsub.f32 %v1810, %v1650
        %v1843 = vsub.f32 %v1811, %v1651
        %v1844 = vsub.f32 %v1812, %v1652
        %v1845 = vsub.f32 %v1813, %v1653
        %v1846 = vsub.f32 %v1814, %v1654
        %v1847 = vsub.f32 %v1815, %v1655
        %v1848 = vsub.f32 %v1816, %v1656
        %v1849 = vsub.f32 %v1817, %v1657
        %v1850 = vsub.f32 %v1818, %v1658
        %v1851 = vsub.f32 %v1819, %v1659
        %v1852 = vsub.f32 %v1820, %v1660
        %v1853 = vsub.f32 %v1821, %v1661
        %v1854 = vsub.f32 %v1822, %v1662
        %v1855 = vsub.f32 %v1823, %v1663
        %v1856 = vsub.f32 %v1824, %v1664
        %v1857 = vsub.f32 %v1825, %v1665
        %v1858 = vsub.f32 %v1826, %v1666
        %v1859 = vsub.f32 %v1827, %v1667
        %v1860 = vsub.f32 %v1828, %v1668
        %v1861 = vsub.f32 %v1829, %v1669
        %v1862 = vsub.f32 %v1830, %v1670
        %v1863 = vsub.f32 %v1831, %v1671
        %v1864 = vmul.f32 %v1832, %v1832
        %v1865 = vmul.f32 %v1833, %v1833
        %v1866 = vmul.f32 %v1834, %v1834
        %v1867 = vmul.f32 %v1835, %v1835
        %v1868 = vmul.f32 %v1836, %v1836
        %v1869 = vmul.f32 %v1837, %v1837
        %v1870 = vmul.f32 %v1838, %v1838
        %v1871 = vmul.f32 %v1839, %v1839
        %v1872 = vmul.f32 %v1840, %v1840
        %v1873 = vmul.f32 %v1841, %v1841
        %v1874 = vmul.f32 %v1842, %v1842
        %v1875 = vmul.f32 %v1843, %v1843
        %v1876 = vmul.f32 %v1844, %v1844
        %v1877 = vmul.f32 %v1845, %v1845
        %v1878 = vmul.f32 %v1846, %v1846
        %v1879 = vmul.f32 %v1847, %v1847
        %v1880 = vmul.f32 %v1848, %v1848
        %v1881 = vmul.f32 %v1849, %v1849
        %v1882 = vmul.f32 %v1850, %v1850
        %v1883 = vmul.f32 %v1851, %v1851
        %v1884 = vmul.f32 %v1852, %v1852
        %v1885 = vmul.f32 %v1853, %v1853
        %v1886 = vmul.f32 %v1854, %v1854
        %v1887 = vmul.f32 %v1855, %v1855
        %v1888 = vmul.f32 %v1856, %v1856
        %v1889 = vmul.f32 %v1857, %v1857
        %v1890 = vmul.f32 %v1858, %v1858
        %v1891 = vmul.f32 %v1859, %v1859
        %v1892 = vmul.f32 %v1860, %v1860
        %v1893 = vmul.f32 %v1861, %v1861
        %v1894 = vmul.f32 %v1862, %v1862
        %v1895 = vmul.f32 %v1863, %v1863
        %v1896 = vlaneseq
        %v1897 = vshrl.u32 %v1896, 7
        %vm1898 = vcmp.eq.s32.totalorder %v1897, 0
        %vm1899 = vmxor %vm1607, %vm1898
        %vm1900 = vmxor %vm1899, 1
        %v1901 = vsel %vm1900, 1.0, 0.0
        %vm1902 = vcmask 195584
        %v1904 = vsel %vm1902, %v1901, 0
        %v1907 = vsel %vm1902, %v1864, 0
        %v1910 = vsel %vm1902, %v1865, 0
        %v1913 = vsel %vm1902, %v1866, 0
        %v1916 = vsel %vm1902, %v1867, 0
        %v1919 = vsel %vm1902, %v1868, 0
        %v1922 = vsel %vm1902, %v1869, 0
        %v1925 = vsel %vm1902, %v1870, 0
        %v1928 = vsel %vm1902, %v1871, 0
        %v1931 = vsel %vm1902, %v1872, 0
        %v1934 = vsel %vm1902, %v1873, 0
        %v1937 = vsel %vm1902, %v1874, 0
        %v1940 = vsel %vm1902, %v1875, 0
        %v1943 = vsel %vm1902, %v1876, 0
        %v1946 = vsel %vm1902, %v1877, 0
        %v1949 = vsel %vm1902, %v1878, 0
        %v1952 = vsel %vm1902, %v1879, 0
        %v1955 = vsel %vm1902, %v1880, 0
        %v1958 = vsel %vm1902, %v1881, 0
        %v1961 = vsel %vm1902, %v1882, 0
        %v1964 = vsel %vm1902, %v1883, 0
        %v1967 = vsel %vm1902, %v1884, 0
        %v1970 = vsel %vm1902, %v1885, 0
        %v1973 = vsel %vm1902, %v1886, 0
        %v1976 = vsel %vm1902, %v1887, 0
        %v1979 = vsel %vm1902, %v1888, 0
        %v1982 = vsel %vm1902, %v1889, 0
        %v1985 = vsel %vm1902, %v1890, 0
        %v1988 = vsel %vm1902, %v1891, 0
        %v1991 = vsel %vm1902, %v1892, 0
        %v1994 = vsel %vm1902, %v1893, 0
        %v1997 = vsel %vm1902, %v1894, 0
        %v2000 = vsel %vm1902, %v1895, 0
        %2002 = vmatprep.subr.mxu0 0.0
        %2003 = vmatpush1.xpose.msra.mxu0 %v1907
        %2004 = vmatprep.subr.mxu0 0.0
        %2005 = vmatpush1.xpose.msra.mxu0 %v1910
        %2006 = vmatprep.subr.mxu0 0.0
        %2007 = vmatpush1.xpose.msra.mxu0 %v1913
        %2008 = vmatprep.subr.mxu0 0.0
        %2009 = vmatpush1.xpose.msra.mxu0 %v1916
        %2010 = vmatprep.subr.mxu0 0.0
        %2011 = vmatpush1.xpose.msra.mxu0 %v1919
        %2012 = vmatprep.subr.mxu0 0.0
        %2013 = vmatpush1.xpose.msra.mxu0 %v1922
        %2014 = vmatprep.subr.mxu0 0.0
        %2015 = vmatpush1.xpose.msra.mxu0 %v1925
        %2016 = vmatprep.subr.mxu0 0.0
        %2017 = vmatpush1.xpose.msra.mxu0 %v1928
        %2018 = vmatprep.subr.mxu0 0.0
        %2019 = vmatpush1.xpose.msra.mxu0 %v1931
        %2020 = vmatprep.subr.mxu0 0.0
        %2021 = vmatpush1.xpose.msra.mxu0 %v1934
        %2022 = vmatprep.subr.mxu0 0.0
        %2023 = vmatpush1.xpose.msra.mxu0 %v1937
        %2024 = vmatprep.subr.mxu0 0.0
        %2025 = vmatpush1.xpose.msra.mxu0 %v1940
        %2026 = vmatprep.subr.mxu0 0.0
        %2027 = vmatpush1.xpose.msra.mxu0 %v1943
        %2028 = vmatprep.subr.mxu0 0.0
        %2029 = vmatpush1.xpose.msra.mxu0 %v1946
        %2030 = vmatprep.subr.mxu0 0.0
        %2031 = vmatpush1.xpose.msra.mxu0 %v1949
        %2032 = vmatprep.subr.mxu0 0.0
        %2033 = vmatpush1.xpose.msra.mxu0 %v1952
        %2034 = vmatprep.subr.mxu0 0.0
        %2035 = vmatpush1.xpose.msra.mxu0 %v1955
        %2036 = vmatprep.subr.mxu0 0.0
        %2037 = vmatpush1.xpose.msra.mxu0 %v1958
        %2038 = vmatprep.subr.mxu0 0.0
        %2039 = vmatpush1.xpose.msra.mxu0 %v1961
        %2040 = vmatprep.subr.mxu0 0.0
        %2041 = vmatpush1.xpose.msra.mxu0 %v1964
        %2042 = vmatprep.subr.mxu0 0.0
        %2043 = vmatpush1.xpose.msra.mxu0 %v1967
        %2044 = vmatprep.subr.mxu0 0.0
        %2045 = vmatpush1.xpose.msra.mxu0 %v1970
        %2046 = vmatprep.subr.mxu0 0.0
        %2047 = vmatpush1.xpose.msra.mxu0 %v1973
        %2048 = vmatprep.subr.mxu0 0.0
        %2049 = vmatpush1.xpose.msra.mxu0 %v1976
        %2050 = vmatprep.subr.mxu0 0.0
        %2051 = vmatpush1.xpose.msra.mxu0 %v1979
        %2052 = vmatprep.subr.mxu0 0.0
        %2053 = vmatpush1.xpose.msra.mxu0 %v1982
        %2054 = vmatprep.subr.mxu0 0.0
        %2055 = vmatpush1.xpose.msra.mxu0 %v1985
        %2056 = vmatprep.subr.mxu0 0.0
        %2057 = vmatpush1.xpose.msra.mxu0 %v1988
        %2058 = vmatprep.subr.mxu0 0.0
        %2059 = vmatpush1.xpose.msra.mxu0 %v1991
        %2060 = vmatprep.subr.mxu0 0.0
        %2061 = vmatpush1.xpose.msra.mxu0 %v1994
        %2062 = vmatprep.subr.mxu0 0.0
        %2063 = vmatpush1.xpose.msra.mxu0 %v1997
        %2064 = vmatprep.subr.mxu0 0.0
        %2065 = vmatpush1.xpose.msra.mxu0 %v2000
        %2066 = vmatprep.mubr.f32.mxu0 0.0
        %2067 = vmatmul.mubr.f32.gmra.mrb[0].mxu0 %v1904
        %v2068 = vpop.f32.mrb[0].mxu0
        %v2069 = vadd.f32 0.0, %v2068
        %v2070 = vpop.f32.mrb[0].mxu0
        %v2071 = vadd.f32 0.0, %v2070
        %2072 = vdwg.mxu0
        %v2073 = vrsqrt.pop %v2069
        %v2074 = vmul.f32 %v2069, %v2073
        %vm2075 = vcmp.eq.f32.partialorder %v2069, inf
        %v2076 = vsel %vm2075, %v2069, %v2074
        %vm2077 = vcmp.eq.f32.partialorder %v2069, 0.0
        %v2078 = vand.u32 %v2069, 2147483648
        %v2079 = vsel %vm2077, %v2078, %v2076
        %v2080 = vrsqrt.pop %v2071
        %v2081 = vmul.f32 %v2071, %v2080
        %vm2082 = vcmp.eq.f32.partialorder %v2071, inf
        %v2083 = vsel %vm2082, %v2071, %v2081
        %vm2084 = vcmp.eq.f32.partialorder %v2071, 0.0
        %v2085 = vand.u32 %v2071, 2147483648
        %v2086 = vsel %vm2084, %v2085, %v2083
        %v2089 = vcombine.low %v2079, %v2086
        %v2091 = vunpack.c.l.s4 1983009808
        %v2092 = vunpack.c.0.s8 %v2091
        %v2093 = vlaneseq
        %v2094 = vshrl.u32 %v2093, 7
        %v2095 = vsub.s32 %v2092, %v2094
        %v2096 = vrot.slane %v2089, %v2095
        %2098 = vst [vmem:[%s394] sm:$0xf] %v2096
        %s2099 = sand.u32 %s235, 1
        %s2100 = scalar_lea.sflag [#allocation3], %s2099
        %s2101 = sand.u32 %s235, 1
        %s2102 = smul.addr %s2101, 4
        %s2103 = scalar_lea.vmem [#allocation2], %s2102
        // Predicated region
        $region57: #{tpu_custom_call.1} parent=55 // pred_check
          %p2104 = pneg %p245
        $region58: #{tpu_custom_call.1} parent=55 // pred_check_branch
          %2106 = sbr.rel (%p2104) target = $region60
        $region59: #{tpu_custom_call.1} parent=55 // pred_region
          %s2107 = smul.u32 2, %s23
          %s2108 = ssub.s32 3, %s2107
          %p2109 = scmp.lt.s32.totalorder %s2108, 2
          %s2110 = scalar_select %p2109, %s2108, 2
          %s2111 = smul.u32 32, %s2110
          %s2113 = ssub.s32 64, %s2111
          %2114 = vsyncadd %s2100, %s2113
          %p2115 = scmp.ne.s32.totalorder 0, %s2111
          %s2116 = smul.addr %s2107, 32
          %s2117 = scalar_lea.hbm %s9, %s2116
          %s2118 = smul.u32 %s2110, 2
          %s2119 = sshll.u32 %s2118, 4
          %s2120 = sshll.u32 %s2103, 4
          %s2121 = int_to_ptr.vmem [resolvable:$true] %s2120
          %2123 = dma.vmem_to_hbm [thread:$0]  (%p2115), %s2121, %s2119, %s2117, %s2100
        $region60: #{tpu_custom_call.1} parent=55 // pred_fallthru
          _
      $region56: #{tpu_custom_call.1} parent=5 // pred_fallthru
        _
      %p2124 = scmp.le.s32.totalorder 2, %s18
      // Predicated region
      $region61: #{tpu_custom_call.1} parent=5 // pred_check
        %p2125 = pneg %p2124
      $region62: #{tpu_custom_call.1} parent=5 // pred_check_branch
        %2127 = sbr.rel (%p2125) target = $region64
      $region63: #{tpu_custom_call.1} parent=5 // pred_region
        %s2128 = ssub.s32 %s18, 2
        // Predicated region
        $region65: #{tpu_custom_call.1} parent=63 // pred_check
          %p2129 = pneg %p251
        $region66: #{tpu_custom_call.1} parent=63 // pred_check_branch
          %2131 = sbr.rel (%p2129) target = $region68
        $region67: #{tpu_custom_call.1} parent=63 // pred_region
          %s2132 = sand.u32 %s236, 1
          %s2133 = scalar_lea.sflag [#allocation3], %s2132
          %s2134 = sand.u32 %s236, 1
          %s2135 = smul.addr %s2134, 4
          %s2136 = scalar_lea.vmem [#allocation2], %s2135
          %2137 = dma.done %s2133, 64
        $region68: #{tpu_custom_call.1} parent=63 // pred_fallthru
          _
      $region64: #{tpu_custom_call.1} parent=5 // pred_fallthru
        _
    $region6: #{tpu_custom_call.1} parent=1 // loop_footer
      %s22 = sadd.s32 1, %s18
    $region7: #{tpu_custom_call.1} parent=1 // loop_footer_branch
      %17 = sbr.rel target = $region3
    $region8: #{tpu_custom_call.1} parent=1 // loop_exit
      _
    %2138 = vsyncpa [#allocation3], 1
    %s2139 = scalar_lea.sflag [#allocation3], 1
    %2140 = vsyncpa %s2139, 1

</llo_original>
